<compile_context>
chip_gen: v7x
topology: tpu7x:2x2x1
jax: 0.10.0
libtpu: 0.0.40
codegen_flags: <defaults>
</compile_context>

<pallas_src>
import math

import jax
import jax.numpy as jnp
from jax.experimental import pallas as pl
from jax.experimental.pallas import tpu as pltpu

NEG_SLOPE = 0.2  # DGL GATConv default negative_slope


def _gat_layer(x, adj_rep, neg_rep, ones_blk, w_pack, b_all,
               num_heads, f_out, n, apply_relu):
    """One dense-adjacency GATConv layer, all heads fused, returns head-mean.

    x        : (N, Fin)       f32 node features
    adj_rep  : (N, H*N)       bf16, H lane-tiled copies of adj_t (adj_t[v,u]=1 iff u->v)
    neg_rep  : (N, H*N)       f32, 0 on edges / -1e30 off edges (H lane-tiled copies)
    ones_blk : (H*N, H)       bf16 block-diagonal ones (per-head segmented row sums)
    w_pack   : (Fin, H*Fout+2H) bf16 packed [W | W@attn_l | W@attn_r]
    b_all    : (1, H*Fout)    f32 packed per-head bias
    Returns (N, Fout) f32 = mean over heads of (relu?)(GAT head outputs).
    """
    hf = num_heads * f_out
    xb = x.astype(jnp.bfloat16)

    # Single merged MXU matmul for projection + attention scalars.
    y = jnp.dot(xb, w_pack, preferred_element_type=jnp.float32)   # (N, hf + 2H)
    z = y[:, :hf]                                                  # (N, H*Fout)
    el = y[:, hf:hf + num_heads]                                   # (N, H) source (u)
    er = y[:, hf + num_heads:hf + 2 * num_heads]                   # (N, H) dest   (v)

    # One transpose per layer (was one per head).
    el_t = jnp.transpose(el)                                       # (H, N)

    # Score slab, heads packed along lanes: block h holds e_h[v, u] = er_h[v] + el_h[u].
    e = jnp.concatenate(
        [er[:, hd:hd + 1] + el_t[hd:hd + 1, :] for hd in range(num_heads)],
        axis=1)                                                    # (N, H*N) f32
    e = jnp.maximum(e, NEG_SLOPE * e)                              # leaky relu (slope<1)

    # Row-wise masked softmax over incoming edges; normalization deferred.
    masked = e + neg_rep                                           # -1e30 on non-edges
    # Shared per-row max across heads: constant per row, cancels exactly in softmax.
    m = jnp.max(masked, axis=-1, keepdims=True)                    # (N, 1), finite
    # bf16 exp (v6e/v7x bf16 EUP); exact zeros off-edge via multiplicative mask.
    p = jnp.exp((masked - m).astype(jnp.bfloat16)) * adj_rep       # (N, H*N) bf16
    # Per-head row sums via MXU against block-diagonal ones (f32 accumulation).
    s = jnp.dot(p, ones_blk, preferred_element_type=jnp.float32)   # (N, H)
    recip = pl.reciprocal(jnp.maximum(s, 1e-12), approx=True)      # (N, H)

    zb = z.astype(jnp.bfloat16)                                    # cast once per layer
    acc = None
    for hd in range(num_heads):
        p_h = p[:, hd * n:(hd + 1) * n]                            # (N, N)  bf16
        z_h = zb[:, hd * f_out:(hd + 1) * f_out]                   # (N, Fout) bf16
        # Unnormalized aggregation: plain MXU matmul; normalize afterwards
        # (N*Fout muls + EUP recip instead of N^2 divides).
        o_h = jnp.dot(p_h, z_h, preferred_element_type=jnp.float32)
        o_h = o_h * recip[:, hd:hd + 1] + b_all[:, hd * f_out:(hd + 1) * f_out]
        if apply_relu:
            o_h = jnp.maximum(o_h, 0.0)
        acc = o_h if acc is None else acc + o_h

    return acc * (1.0 / num_heads)                                 # head mean


def _make_caselink_kernel(layer_num, num_heads, f_outs, n):
    """Build the fully-fused CaseLink forward kernel for a static layer count."""

    def kernel(*refs):
        x_ref, adjt_ref, ones_ref = refs[0], refs[1], refs[2]
        out_ref = refs[-1]
        param_refs = refs[3:-1]

        x0 = x_ref[...]                                  # (N, in_dim) f32
        adj_bf = adjt_ref[...]                           # (N, N) bf16, (v, u) layout
        ones_blk = ones_ref[...]                         # (H*N, H) bf16

        # Head- and layer-invariant mask work, hoisted to kernel entry.
        neg_mask = (adj_bf.astype(jnp.float32) - 1.0) * 1e30        # 0 / -1e30
        neg_rep = jnp.concatenate([neg_mask] * num_heads, axis=1)   # (N, H*N) f32
        adj_rep = jnp.concatenate([adj_bf] * num_heads, axis=1)     # (N, H*N) bf16

        h = x0
        for l in range(layer_num):
            w_pack = param_refs[2 * l][...]
            b_all = param_refs[2 * l + 1][...]
            h = _gat_layer(h, adj_rep, neg_rep, ones_blk, w_pack, b_all,
                           num_heads, f_outs[l], n,
                           apply_relu=(l < layer_num - 1))
        # Final head-mean already done inside _gat_layer; add residual.
        out_ref[...] = h + x0

    return kernel


def pack_gat_params(w, attn_l, attn_r, bias):
    """Pack DGL-style GATConv params into the fused-kernel layout."""
    f_in, hf = w.shape
    num_heads, _, f_out = attn_l.shape
    assert hf == num_heads * f_out
    w3 = w.reshape(f_in, num_heads, f_out)
    # Fold attention vectors into the projection:  wl[:, h] = W_h @ attn_l_h.
    wl = jnp.einsum("fhk,hk->fh", w3, attn_l[:, 0, :])          # (Fin, H)
    wr = jnp.einsum("fhk,hk->fh", w3, attn_r[:, 0, :])          # (Fin, H)
    # Single packed weight so the kernel does ONE projection matmul per layer.
    w_pack = jnp.concatenate([w, wl, wr], axis=1).astype(jnp.bfloat16)  # (Fin, H*Fout+2H)
    b_all = bias.reshape(1, num_heads * f_out).astype(jnp.float32)
    return (w_pack, b_all)


def caselink_forward(params, adj, in_feat, layer_num):
    """CaseLink.forward with a dense-adjacency graph `adj` (adj[u,v]=1 iff u->v)."""
    n, in_dim = in_feat.shape
    # Pre-transpose once in the wrapper so kernel scores are in (v, u) layout;
    # pass as bf16 to halve the adjacency DMA / VMEM footprint.
    adj_t = jnp.transpose(adj).astype(jnp.bfloat16)

    layer_names = ("gat1", "gat2", "gat3")[:layer_num]
    num_heads = params["gat1"][1].shape[0]
    packed, f_outs = [], []
    for name in layer_names:
        w, al, ar, b = params[name]
        f_outs.append(al.shape[2])
        packed.extend(pack_gat_params(w, al, ar, b))
    out_dim = f_outs[-1]
    assert out_dim == in_dim, "residual connection requires out_dim == in_dim"

    # Block-diagonal ones (H*N, H): per-head segmented row sums via one MXU matmul.
    ones_blk = (jnp.arange(num_heads * n)[:, None] // n
                == jnp.arange(num_heads)[None, :]).astype(jnp.bfloat16)

    kernel = _make_caselink_kernel(layer_num, num_heads, tuple(f_outs), n)
    inputs = [in_feat.astype(jnp.float32), adj_t, ones_blk] + packed

    in_specs = [
        pl.BlockSpec(a.shape, lambda i, nd=a.ndim: (0,) * nd) for a in inputs
    ]

    return pl.pallas_call(
        kernel,
        out_shape=jax.ShapeDtypeStruct((n, out_dim), jnp.float32),
        grid_spec=pltpu.PrefetchScalarGridSpec(
            num_scalar_prefetch=0,
            grid=(1,),
            in_specs=in_specs,
            out_specs=pl.BlockSpec((n, out_dim), lambda i: (0, 0)),
        ),
        compiler_params=pltpu.CompilerParams(
            dimension_semantics=("arbitrary",)),
    )(*inputs)


def init_gat_params(key, f_in, f_out, num_heads, stdv):
    """DGL GATConv parameter shapes, uniform(-stdv, stdv) like reset_parameters."""
    k1, k2, k3, k4 = jax.random.split(key, 4)
    w = jax.random.uniform(k1, (f_in, num_heads * f_out), jnp.float32, -stdv, stdv)
    attn_l = jax.random.uniform(k2, (num_heads, 1, f_out), jnp.float32, -stdv, stdv)
    attn_r = jax.random.uniform(k3, (num_heads, 1, f_out), jnp.float32, -stdv, stdv)
    bias = jax.random.uniform(k4, (num_heads, 1, f_out), jnp.float32, -stdv, stdv)
    return (w, attn_l, attn_r, bias)


if __name__ == "__main__":
    # Small shapes consistent with the module (residual requires out_dim == in_dim).
    N = 16          # number of graph nodes
    in_dim = 32
    h_dim = 32
    out_dim = 32
    num_heads = 4
    layer_num = 2
    # dropout = 0.0 (eval mode -> no-op)

    key = jax.random.PRNGKey(0)
    k_feat, k_adj, k_g1, k_g2, k_g3 = jax.random.split(key, 5)

    in_feat = jax.random.normal(k_feat, (N, in_dim), jnp.float32)

    # Random directed graph with self-loops (in-degree >= 1, matching typical
    # CaseLink graph construction). Zero in-degree nodes would get exactly `bias`
    # (DGL allow_zero_in_degree=True semantics).
    adj = (jax.random.uniform(k_adj, (N, N)) < 0.3).astype(jnp.float32)
    adj = jnp.maximum(adj, jnp.eye(N, dtype=jnp.float32))

    stdv = 1.0 / math.sqrt(h_dim)
    params = {
        "gat1": init_gat_params(k_g1, in_dim, h_dim, num_heads, stdv),
        "gat2": init_gat_params(k_g2, h_dim, out_dim, num_heads, stdv),
        "gat3": init_gat_params(k_g3, h_dim, out_dim, num_heads, stdv),
    }

    out = caselink_forward(params, adj, in_feat, layer_num)
    out = jax.block_until_ready(out)
    assert out.shape == (N, out_dim) and out.dtype == jnp.float32
    assert bool(jnp.all(jnp.isfinite(out)))
    print("KERNEL_OK")
</pallas_src>

<mosaic_0001>
module attributes {stable_mosaic.version = 11 : i64} {
  func.func @kernel(%arg0: i32, %arg1: memref<16x32xf32, #tpu.memory_space<vmem>>, %arg2: memref<16x16xbf16, #tpu.memory_space<vmem>>, %arg3: memref<64x4xbf16, #tpu.memory_space<vmem>>, %arg4: memref<32x136xbf16, #tpu.memory_space<vmem>>, %arg5: memref<1x128xf32, #tpu.memory_space<vmem>>, %arg6: memref<32x136xbf16, #tpu.memory_space<vmem>>, %arg7: memref<1x128xf32, #tpu.memory_space<vmem>>, %arg8: memref<16x32xf32, #tpu.memory_space<vmem>>) attributes {dimension_semantics = [#tpu.dimension_semantics<arbitrary>], iteration_bounds = array<i64: 1>, scalar_prefetch = 0 : i64, scratch_operands = 0 : i64, tpu.core_type = #tpu.core_type<tc>, window_params = [{pipeline_mode = #tpu.pipeline_mode<synchronous>, transform_indices = @transform_0, window_bounds = array<i64: 16, 32>}, {pipeline_mode = #tpu.pipeline_mode<synchronous>, transform_indices = @transform_1, window_bounds = array<i64: 16, 16>}, {pipeline_mode = #tpu.pipeline_mode<synchronous>, transform_indices = @transform_2, window_bounds = array<i64: 64, 4>}, {pipeline_mode = #tpu.pipeline_mode<synchronous>, transform_indices = @transform_3, window_bounds = array<i64: 32, 136>}, {pipeline_mode = #tpu.pipeline_mode<synchronous>, transform_indices = @transform_4, window_bounds = array<i64: 1, 128>}, {pipeline_mode = #tpu.pipeline_mode<synchronous>, transform_indices = @transform_5, window_bounds = array<i64: 32, 136>}, {pipeline_mode = #tpu.pipeline_mode<synchronous>, transform_indices = @transform_6, window_bounds = array<i64: 1, 128>}, {pipeline_mode = #tpu.pipeline_mode<synchronous>, transform_indices = @transform_7, window_bounds = array<i64: 16, 32>}]} {
    %c0 = arith.constant 0 : index
    %c0_0 = arith.constant 0 : index
    %0 = vector.load %arg1[%c0, %c0_0] : memref<16x32xf32, #tpu.memory_space<vmem>>, vector<16x32xf32>
    %c0_1 = arith.constant 0 : index
    %c0_2 = arith.constant 0 : index
    %1 = vector.load %arg2[%c0_1, %c0_2] : memref<16x16xbf16, #tpu.memory_space<vmem>>, vector<16x16xbf16>
    %c0_3 = arith.constant 0 : index
    %c0_4 = arith.constant 0 : index
    %2 = vector.load %arg3[%c0_3, %c0_4] : memref<64x4xbf16, #tpu.memory_space<vmem>>, vector<64x4xbf16>
    %3 = arith.extf %1 : vector<16x16xbf16> to vector<16x16xf32>
    %cst = arith.constant 1.000000e+00 : f32
    %4 = vector.broadcast %cst : f32 to vector<16x16xf32>
    %5 = arith.subf %3, %4 : vector<16x16xf32>
    %cst_5 = arith.constant 1.000000e+30 : f32
    %6 = vector.broadcast %cst_5 : f32 to vector<16x16xf32>
    %7 = arith.mulf %5, %6 : vector<16x16xf32>
    %8 = tpu.concatenate %7, %7, %7, %7 in 1 : vector<16x16xf32>, vector<16x16xf32>, vector<16x16xf32>, vector<16x16xf32> -> vector<16x64xf32>
    %9 = tpu.concatenate %1, %1, %1, %1 in 1 : vector<16x16xbf16>, vector<16x16xbf16>, vector<16x16xbf16>, vector<16x16xbf16> -> vector<16x64xbf16>
    %c0_6 = arith.constant 0 : index
    %c0_7 = arith.constant 0 : index
    %10 = vector.load %arg4[%c0_6, %c0_7] : memref<32x136xbf16, #tpu.memory_space<vmem>>, vector<32x136xbf16>
    %c0_8 = arith.constant 0 : index
    %c0_9 = arith.constant 0 : index
    %11 = vector.load %arg5[%c0_8, %c0_9] : memref<1x128xf32, #tpu.memory_space<vmem>>, vector<1x128xf32>
    %12 = arith.truncf %0 : vector<16x32xf32> to vector<16x32xbf16>
    %cst_10 = arith.constant dense<0.000000e+00> : vector<16x136xf32>
    %13 = tpu.matmul %12, %10, %cst_10 {dimension_numbers = #tpu.dot_dimension_numbers<[1], [0], [0], [1], [0, 0, 1, 1], [], []>} : vector<16x32xbf16>, vector<32x136xbf16>, vector<16x136xf32> -> vector<16x136xf32>
    %14 = vector.extract_strided_slice %13 {offsets = [0, 0], sizes = [16, 128], strides = [1, 1]} : vector<16x136xf32> to vector<16x128xf32>
    %15 = vector.extract_strided_slice %13 {offsets = [0, 128], sizes = [16, 4], strides = [1, 1]} : vector<16x136xf32> to vector<16x4xf32>
    %16 = vector.extract_strided_slice %13 {offsets = [0, 132], sizes = [16, 4], strides = [1, 1]} : vector<16x136xf32> to vector<16x4xf32>
    %17 = tpu.transpose %15, [1, 0] : vector<16x4xf32> -> vector<4x16xf32>
    %18 = vector.extract_strided_slice %16 {offsets = [0, 0], sizes = [16, 1], strides = [1, 1]} : vector<16x4xf32> to vector<16x1xf32>
    %19 = vector.extract_strided_slice %17 {offsets = [0, 0], sizes = [1, 16], strides = [1, 1]} : vector<4x16xf32> to vector<1x16xf32>
    %20 = vector.broadcast %18 : vector<16x1xf32> to vector<16x16xf32>
    %21 = vector.broadcast %19 : vector<1x16xf32> to vector<16x16xf32>
    %22 = arith.addf %20, %21 : vector<16x16xf32>
    %23 = vector.extract_strided_slice %16 {offsets = [0, 1], sizes = [16, 1], strides = [1, 1]} : vector<16x4xf32> to vector<16x1xf32>
    %24 = vector.extract_strided_slice %17 {offsets = [1, 0], sizes = [1, 16], strides = [1, 1]} : vector<4x16xf32> to vector<1x16xf32>
    %25 = vector.broadcast %23 : vector<16x1xf32> to vector<16x16xf32>
    %26 = vector.broadcast %24 : vector<1x16xf32> to vector<16x16xf32>
    %27 = arith.addf %25, %26 : vector<16x16xf32>
    %28 = vector.extract_strided_slice %16 {offsets = [0, 2], sizes = [16, 1], strides = [1, 1]} : vector<16x4xf32> to vector<16x1xf32>
    %29 = vector.extract_strided_slice %17 {offsets = [2, 0], sizes = [1, 16], strides = [1, 1]} : vector<4x16xf32> to vector<1x16xf32>
    %30 = vector.broadcast %28 : vector<16x1xf32> to vector<16x16xf32>
    %31 = vector.broadcast %29 : vector<1x16xf32> to vector<16x16xf32>
    %32 = arith.addf %30, %31 : vector<16x16xf32>
    %33 = vector.extract_strided_slice %16 {offsets = [0, 3], sizes = [16, 1], strides = [1, 1]} : vector<16x4xf32> to vector<16x1xf32>
    %34 = vector.extract_strided_slice %17 {offsets = [3, 0], sizes = [1, 16], strides = [1, 1]} : vector<4x16xf32> to vector<1x16xf32>
    %35 = vector.broadcast %33 : vector<16x1xf32> to vector<16x16xf32>
    %36 = vector.broadcast %34 : vector<1x16xf32> to vector<16x16xf32>
    %37 = arith.addf %35, %36 : vector<16x16xf32>
    %38 = tpu.concatenate %22, %27, %32, %37 in 1 : vector<16x16xf32>, vector<16x16xf32>, vector<16x16xf32>, vector<16x16xf32> -> vector<16x64xf32>
    %cst_11 = arith.constant 2.000000e-01 : f32
    %39 = vector.broadcast %cst_11 : f32 to vector<16x64xf32>
    %40 = arith.mulf %39, %38 : vector<16x64xf32>
    %41 = arith.maximumf %38, %40 : vector<16x64xf32>
    %42 = arith.addf %41, %8 : vector<16x64xf32>
    %cst_12 = arith.constant dense<0xFF800000> : vector<16xf32>
    %43 = vector.multi_reduction <maximumf>, %42, %cst_12 [1] : vector<16x64xf32> to vector<16xf32>
    %44 = vector.shape_cast %43 : vector<16xf32> to vector<16x1xf32>
    %45 = vector.broadcast %44 : vector<16x1xf32> to vector<16x64xf32>
    %46 = arith.subf %42, %45 : vector<16x64xf32>
    %47 = arith.truncf %46 : vector<16x64xf32> to vector<16x64xbf16>
    %48 = math.exp %47 : vector<16x64xbf16>
    %49 = arith.mulf %48, %9 : vector<16x64xbf16>
    %cst_13 = arith.constant dense<0.000000e+00> : vector<16x4xf32>
    %50 = tpu.matmul %49, %2, %cst_13 {dimension_numbers = #tpu.dot_dimension_numbers<[1], [0], [0], [1], [0, 0, 1, 1], [], []>} : vector<16x64xbf16>, vector<64x4xbf16>, vector<16x4xf32> -> vector<16x4xf32>
    %cst_14 = arith.constant 9.99999996E-13 : f32
    %51 = vector.broadcast %cst_14 : f32 to vector<16x4xf32>
    %52 = arith.maximumf %50, %51 : vector<16x4xf32>
    %53 = tpu.reciprocal %52 {approx = true} : vector<16x4xf32> -> vector<16x4xf32>
    %54 = arith.truncf %14 : vector<16x128xf32> to vector<16x128xbf16>
    %55 = vector.extract_strided_slice %49 {offsets = [0, 0], sizes = [16, 16], strides = [1, 1]} : vector<16x64xbf16> to vector<16x16xbf16>
    %56 = vector.extract_strided_slice %54 {offsets = [0, 0], sizes = [16, 32], strides = [1, 1]} : vector<16x128xbf16> to vector<16x32xbf16>
    %cst_15 = arith.constant dense<0.000000e+00> : vector<16x32xf32>
    %57 = tpu.matmul %55, %56, %cst_15 {dimension_numbers = #tpu.dot_dimension_numbers<[1], [0], [0], [1], [0, 0, 1, 1], [], []>} : vector<16x16xbf16>, vector<16x32xbf16>, vector<16x32xf32> -> vector<16x32xf32>
    %58 = vector.extract_strided_slice %53 {offsets = [0, 0], sizes = [16, 1], strides = [1, 1]} : vector<16x4xf32> to vector<16x1xf32>
    %59 = vector.broadcast %58 : vector<16x1xf32> to vector<16x32xf32>
    %60 = arith.mulf %57, %59 : vector<16x32xf32>
    %61 = vector.extract_strided_slice %11 {offsets = [0, 0], sizes = [1, 32], strides = [1, 1]} : vector<1x128xf32> to vector<1x32xf32>
    %62 = vector.broadcast %61 : vector<1x32xf32> to vector<16x32xf32>
    %63 = arith.addf %60, %62 : vector<16x32xf32>
    %cst_16 = arith.constant 0.000000e+00 : f32
    %64 = vector.broadcast %cst_16 : f32 to vector<16x32xf32>
    %65 = arith.maximumf %63, %64 : vector<16x32xf32>
    %66 = vector.extract_strided_slice %49 {offsets = [0, 16], sizes = [16, 16], strides = [1, 1]} : vector<16x64xbf16> to vector<16x16xbf16>
    %67 = vector.extract_strided_slice %54 {offsets = [0, 32], sizes = [16, 32], strides = [1, 1]} : vector<16x128xbf16> to vector<16x32xbf16>
    %cst_17 = arith.constant dense<0.000000e+00> : vector<16x32xf32>
    %68 = tpu.matmul %66, %67, %cst_17 {dimension_numbers = #tpu.dot_dimension_numbers<[1], [0], [0], [1], [0, 0, 1, 1], [], []>} : vector<16x16xbf16>, vector<16x32xbf16>, vector<16x32xf32> -> vector<16x32xf32>
    %69 = vector.extract_strided_slice %53 {offsets = [0, 1], sizes = [16, 1], strides = [1, 1]} : vector<16x4xf32> to vector<16x1xf32>
    %70 = vector.broadcast %69 : vector<16x1xf32> to vector<16x32xf32>
    %71 = arith.mulf %68, %70 : vector<16x32xf32>
    %72 = vector.extract_strided_slice %11 {offsets = [0, 32], sizes = [1, 32], strides = [1, 1]} : vector<1x128xf32> to vector<1x32xf32>
    %73 = vector.broadcast %72 : vector<1x32xf32> to vector<16x32xf32>
    %74 = arith.addf %71, %73 : vector<16x32xf32>
    %cst_18 = arith.constant 0.000000e+00 : f32
    %75 = vector.broadcast %cst_18 : f32 to vector<16x32xf32>
    %76 = arith.maximumf %74, %75 : vector<16x32xf32>
    %77 = arith.addf %65, %76 : vector<16x32xf32>
    %78 = vector.extract_strided_slice %49 {offsets = [0, 32], sizes = [16, 16], strides = [1, 1]} : vector<16x64xbf16> to vector<16x16xbf16>
    %79 = vector.extract_strided_slice %54 {offsets = [0, 64], sizes = [16, 32], strides = [1, 1]} : vector<16x128xbf16> to vector<16x32xbf16>
    %cst_19 = arith.constant dense<0.000000e+00> : vector<16x32xf32>
    %80 = tpu.matmul %78, %79, %cst_19 {dimension_numbers = #tpu.dot_dimension_numbers<[1], [0], [0], [1], [0, 0, 1, 1], [], []>} : vector<16x16xbf16>, vector<16x32xbf16>, vector<16x32xf32> -> vector<16x32xf32>
    %81 = vector.extract_strided_slice %53 {offsets = [0, 2], sizes = [16, 1], strides = [1, 1]} : vector<16x4xf32> to vector<16x1xf32>
    %82 = vector.broadcast %81 : vector<16x1xf32> to vector<16x32xf32>
    %83 = arith.mulf %80, %82 : vector<16x32xf32>
    %84 = vector.extract_strided_slice %11 {offsets = [0, 64], sizes = [1, 32], strides = [1, 1]} : vector<1x128xf32> to vector<1x32xf32>
    %85 = vector.broadcast %84 : vector<1x32xf32> to vector<16x32xf32>
    %86 = arith.addf %83, %85 : vector<16x32xf32>
    %cst_20 = arith.constant 0.000000e+00 : f32
    %87 = vector.broadcast %cst_20 : f32 to vector<16x32xf32>
    %88 = arith.maximumf %86, %87 : vector<16x32xf32>
    %89 = arith.addf %77, %88 : vector<16x32xf32>
    %90 = vector.extract_strided_slice %49 {offsets = [0, 48], sizes = [16, 16], strides = [1, 1]} : vector<16x64xbf16> to vector<16x16xbf16>
    %91 = vector.extract_strided_slice %54 {offsets = [0, 96], sizes = [16, 32], strides = [1, 1]} : vector<16x128xbf16> to vector<16x32xbf16>
    %cst_21 = arith.constant dense<0.000000e+00> : vector<16x32xf32>
    %92 = tpu.matmul %90, %91, %cst_21 {dimension_numbers = #tpu.dot_dimension_numbers<[1], [0], [0], [1], [0, 0, 1, 1], [], []>} : vector<16x16xbf16>, vector<16x32xbf16>, vector<16x32xf32> -> vector<16x32xf32>
    %93 = vector.extract_strided_slice %53 {offsets = [0, 3], sizes = [16, 1], strides = [1, 1]} : vector<16x4xf32> to vector<16x1xf32>
    %94 = vector.broadcast %93 : vector<16x1xf32> to vector<16x32xf32>
    %95 = arith.mulf %92, %94 : vector<16x32xf32>
    %96 = vector.extract_strided_slice %11 {offsets = [0, 96], sizes = [1, 32], strides = [1, 1]} : vector<1x128xf32> to vector<1x32xf32>
    %97 = vector.broadcast %96 : vector<1x32xf32> to vector<16x32xf32>
    %98 = arith.addf %95, %97 : vector<16x32xf32>
    %cst_22 = arith.constant 0.000000e+00 : f32
    %99 = vector.broadcast %cst_22 : f32 to vector<16x32xf32>
    %100 = arith.maximumf %98, %99 : vector<16x32xf32>
    %101 = arith.addf %89, %100 : vector<16x32xf32>
    %cst_23 = arith.constant 2.500000e-01 : f32
    %102 = vector.broadcast %cst_23 : f32 to vector<16x32xf32>
    %103 = arith.mulf %101, %102 : vector<16x32xf32>
    %c0_24 = arith.constant 0 : index
    %c0_25 = arith.constant 0 : index
    %104 = vector.load %arg6[%c0_24, %c0_25] : memref<32x136xbf16, #tpu.memory_space<vmem>>, vector<32x136xbf16>
    %c0_26 = arith.constant 0 : index
    %c0_27 = arith.constant 0 : index
    %105 = vector.load %arg7[%c0_26, %c0_27] : memref<1x128xf32, #tpu.memory_space<vmem>>, vector<1x128xf32>
    %106 = arith.truncf %103 : vector<16x32xf32> to vector<16x32xbf16>
    %cst_28 = arith.constant dense<0.000000e+00> : vector<16x136xf32>
    %107 = tpu.matmul %106, %104, %cst_28 {dimension_numbers = #tpu.dot_dimension_numbers<[1], [0], [0], [1], [0, 0, 1, 1], [], []>} : vector<16x32xbf16>, vector<32x136xbf16>, vector<16x136xf32> -> vector<16x136xf32>
    %108 = vector.extract_strided_slice %107 {offsets = [0, 0], sizes = [16, 128], strides = [1, 1]} : vector<16x136xf32> to vector<16x128xf32>
    %109 = vector.extract_strided_slice %107 {offsets = [0, 128], sizes = [16, 4], strides = [1, 1]} : vector<16x136xf32> to vector<16x4xf32>
    %110 = vector.extract_strided_slice %107 {offsets = [0, 132], sizes = [16, 4], strides = [1, 1]} : vector<16x136xf32> to vector<16x4xf32>
    %111 = tpu.transpose %109, [1, 0] : vector<16x4xf32> -> vector<4x16xf32>
    %112 = vector.extract_strided_slice %110 {offsets = [0, 0], sizes = [16, 1], strides = [1, 1]} : vector<16x4xf32> to vector<16x1xf32>
    %113 = vector.extract_strided_slice %111 {offsets = [0, 0], sizes = [1, 16], strides = [1, 1]} : vector<4x16xf32> to vector<1x16xf32>
    %114 = vector.broadcast %112 : vector<16x1xf32> to vector<16x16xf32>
    %115 = vector.broadcast %113 : vector<1x16xf32> to vector<16x16xf32>
    %116 = arith.addf %114, %115 : vector<16x16xf32>
    %117 = vector.extract_strided_slice %110 {offsets = [0, 1], sizes = [16, 1], strides = [1, 1]} : vector<16x4xf32> to vector<16x1xf32>
    %118 = vector.extract_strided_slice %111 {offsets = [1, 0], sizes = [1, 16], strides = [1, 1]} : vector<4x16xf32> to vector<1x16xf32>
    %119 = vector.broadcast %117 : vector<16x1xf32> to vector<16x16xf32>
    %120 = vector.broadcast %118 : vector<1x16xf32> to vector<16x16xf32>
    %121 = arith.addf %119, %120 : vector<16x16xf32>
    %122 = vector.extract_strided_slice %110 {offsets = [0, 2], sizes = [16, 1], strides = [1, 1]} : vector<16x4xf32> to vector<16x1xf32>
    %123 = vector.extract_strided_slice %111 {offsets = [2, 0], sizes = [1, 16], strides = [1, 1]} : vector<4x16xf32> to vector<1x16xf32>
    %124 = vector.broadcast %122 : vector<16x1xf32> to vector<16x16xf32>
    %125 = vector.broadcast %123 : vector<1x16xf32> to vector<16x16xf32>
    %126 = arith.addf %124, %125 : vector<16x16xf32>
    %127 = vector.extract_strided_slice %110 {offsets = [0, 3], sizes = [16, 1], strides = [1, 1]} : vector<16x4xf32> to vector<16x1xf32>
    %128 = vector.extract_strided_slice %111 {offsets = [3, 0], sizes = [1, 16], strides = [1, 1]} : vector<4x16xf32> to vector<1x16xf32>
    %129 = vector.broadcast %127 : vector<16x1xf32> to vector<16x16xf32>
    %130 = vector.broadcast %128 : vector<1x16xf32> to vector<16x16xf32>
    %131 = arith.addf %129, %130 : vector<16x16xf32>
    %132 = tpu.concatenate %116, %121, %126, %131 in 1 : vector<16x16xf32>, vector<16x16xf32>, vector<16x16xf32>, vector<16x16xf32> -> vector<16x64xf32>
    %cst_29 = arith.constant 2.000000e-01 : f32
    %133 = vector.broadcast %cst_29 : f32 to vector<16x64xf32>
    %134 = arith.mulf %133, %132 : vector<16x64xf32>
    %135 = arith.maximumf %132, %134 : vector<16x64xf32>
    %136 = arith.addf %135, %8 : vector<16x64xf32>
    %cst_30 = arith.constant dense<0xFF800000> : vector<16xf32>
    %137 = vector.multi_reduction <maximumf>, %136, %cst_30 [1] : vector<16x64xf32> to vector<16xf32>
    %138 = vector.shape_cast %137 : vector<16xf32> to vector<16x1xf32>
    %139 = vector.broadcast %138 : vector<16x1xf32> to vector<16x64xf32>
    %140 = arith.subf %136, %139 : vector<16x64xf32>
    %141 = arith.truncf %140 : vector<16x64xf32> to vector<16x64xbf16>
    %142 = math.exp %141 : vector<16x64xbf16>
    %143 = arith.mulf %142, %9 : vector<16x64xbf16>
    %cst_31 = arith.constant dense<0.000000e+00> : vector<16x4xf32>
    %144 = tpu.matmul %143, %2, %cst_31 {dimension_numbers = #tpu.dot_dimension_numbers<[1], [0], [0], [1], [0, 0, 1, 1], [], []>} : vector<16x64xbf16>, vector<64x4xbf16>, vector<16x4xf32> -> vector<16x4xf32>
    %cst_32 = arith.constant 9.99999996E-13 : f32
    %145 = vector.broadcast %cst_32 : f32 to vector<16x4xf32>
    %146 = arith.maximumf %144, %145 : vector<16x4xf32>
    %147 = tpu.reciprocal %146 {approx = true} : vector<16x4xf32> -> vector<16x4xf32>
    %148 = arith.truncf %108 : vector<16x128xf32> to vector<16x128xbf16>
    %149 = vector.extract_strided_slice %143 {offsets = [0, 0], sizes = [16, 16], strides = [1, 1]} : vector<16x64xbf16> to vector<16x16xbf16>
    %150 = vector.extract_strided_slice %148 {offsets = [0, 0], sizes = [16, 32], strides = [1, 1]} : vector<16x128xbf16> to vector<16x32xbf16>
    %cst_33 = arith.constant dense<0.000000e+00> : vector<16x32xf32>
    %151 = tpu.matmul %149, %150, %cst_33 {dimension_numbers = #tpu.dot_dimension_numbers<[1], [0], [0], [1], [0, 0, 1, 1], [], []>} : vector<16x16xbf16>, vector<16x32xbf16>, vector<16x32xf32> -> vector<16x32xf32>
    %152 = vector.extract_strided_slice %147 {offsets = [0, 0], sizes = [16, 1], strides = [1, 1]} : vector<16x4xf32> to vector<16x1xf32>
    %153 = vector.broadcast %152 : vector<16x1xf32> to vector<16x32xf32>
    %154 = arith.mulf %151, %153 : vector<16x32xf32>
    %155 = vector.extract_strided_slice %105 {offsets = [0, 0], sizes = [1, 32], strides = [1, 1]} : vector<1x128xf32> to vector<1x32xf32>
    %156 = vector.broadcast %155 : vector<1x32xf32> to vector<16x32xf32>
    %157 = arith.addf %154, %156 : vector<16x32xf32>
    %158 = vector.extract_strided_slice %143 {offsets = [0, 16], sizes = [16, 16], strides = [1, 1]} : vector<16x64xbf16> to vector<16x16xbf16>
    %159 = vector.extract_strided_slice %148 {offsets = [0, 32], sizes = [16, 32], strides = [1, 1]} : vector<16x128xbf16> to vector<16x32xbf16>
    %cst_34 = arith.constant dense<0.000000e+00> : vector<16x32xf32>
    %160 = tpu.matmul %158, %159, %cst_34 {dimension_numbers = #tpu.dot_dimension_numbers<[1], [0], [0], [1], [0, 0, 1, 1], [], []>} : vector<16x16xbf16>, vector<16x32xbf16>, vector<16x32xf32> -> vector<16x32xf32>
    %161 = vector.extract_strided_slice %147 {offsets = [0, 1], sizes = [16, 1], strides = [1, 1]} : vector<16x4xf32> to vector<16x1xf32>
    %162 = vector.broadcast %161 : vector<16x1xf32> to vector<16x32xf32>
    %163 = arith.mulf %160, %162 : vector<16x32xf32>
    %164 = vector.extract_strided_slice %105 {offsets = [0, 32], sizes = [1, 32], strides = [1, 1]} : vector<1x128xf32> to vector<1x32xf32>
    %165 = vector.broadcast %164 : vector<1x32xf32> to vector<16x32xf32>
    %166 = arith.addf %163, %165 : vector<16x32xf32>
    %167 = arith.addf %157, %166 : vector<16x32xf32>
    %168 = vector.extract_strided_slice %143 {offsets = [0, 32], sizes = [16, 16], strides = [1, 1]} : vector<16x64xbf16> to vector<16x16xbf16>
    %169 = vector.extract_strided_slice %148 {offsets = [0, 64], sizes = [16, 32], strides = [1, 1]} : vector<16x128xbf16> to vector<16x32xbf16>
    %cst_35 = arith.constant dense<0.000000e+00> : vector<16x32xf32>
    %170 = tpu.matmul %168, %169, %cst_35 {dimension_numbers = #tpu.dot_dimension_numbers<[1], [0], [0], [1], [0, 0, 1, 1], [], []>} : vector<16x16xbf16>, vector<16x32xbf16>, vector<16x32xf32> -> vector<16x32xf32>
    %171 = vector.extract_strided_slice %147 {offsets = [0, 2], sizes = [16, 1], strides = [1, 1]} : vector<16x4xf32> to vector<16x1xf32>
    %172 = vector.broadcast %171 : vector<16x1xf32> to vector<16x32xf32>
    %173 = arith.mulf %170, %172 : vector<16x32xf32>
    %174 = vector.extract_strided_slice %105 {offsets = [0, 64], sizes = [1, 32], strides = [1, 1]} : vector<1x128xf32> to vector<1x32xf32>
    %175 = vector.broadcast %174 : vector<1x32xf32> to vector<16x32xf32>
    %176 = arith.addf %173, %175 : vector<16x32xf32>
    %177 = arith.addf %167, %176 : vector<16x32xf32>
    %178 = vector.extract_strided_slice %143 {offsets = [0, 48], sizes = [16, 16], strides = [1, 1]} : vector<16x64xbf16> to vector<16x16xbf16>
    %179 = vector.extract_strided_slice %148 {offsets = [0, 96], sizes = [16, 32], strides = [1, 1]} : vector<16x128xbf16> to vector<16x32xbf16>
    %cst_36 = arith.constant dense<0.000000e+00> : vector<16x32xf32>
    %180 = tpu.matmul %178, %179, %cst_36 {dimension_numbers = #tpu.dot_dimension_numbers<[1], [0], [0], [1], [0, 0, 1, 1], [], []>} : vector<16x16xbf16>, vector<16x32xbf16>, vector<16x32xf32> -> vector<16x32xf32>
    %181 = vector.extract_strided_slice %147 {offsets = [0, 3], sizes = [16, 1], strides = [1, 1]} : vector<16x4xf32> to vector<16x1xf32>
    %182 = vector.broadcast %181 : vector<16x1xf32> to vector<16x32xf32>
    %183 = arith.mulf %180, %182 : vector<16x32xf32>
    %184 = vector.extract_strided_slice %105 {offsets = [0, 96], sizes = [1, 32], strides = [1, 1]} : vector<1x128xf32> to vector<1x32xf32>
    %185 = vector.broadcast %184 : vector<1x32xf32> to vector<16x32xf32>
    %186 = arith.addf %183, %185 : vector<16x32xf32>
    %187 = arith.addf %177, %186 : vector<16x32xf32>
    %cst_37 = arith.constant 2.500000e-01 : f32
    %188 = vector.broadcast %cst_37 : f32 to vector<16x32xf32>
    %189 = arith.mulf %187, %188 : vector<16x32xf32>
    %190 = arith.addf %189, %0 : vector<16x32xf32>
    %c0_38 = arith.constant 0 : index
    %c0_39 = arith.constant 0 : index
    %191 = vector.load %arg8[%c0_38, %c0_39] : memref<16x32xf32, #tpu.memory_space<vmem>>, vector<16x32xf32>
    tpu.vector_store %arg8[%c0_38, %c0_39], %190 {strides = array<i32>} : memref<16x32xf32, #tpu.memory_space<vmem>>, vector<16x32xf32>,
    return
  }
  func.func @transform_0(%arg0: i32) -> (i32, i32) {
    %c0_i32 = arith.constant 0 : i32
    %c0_i32_0 = arith.constant 0 : i32
    %c0_i32_1 = arith.constant 0 : i32
    return %c0_i32, %c0_i32_0 : i32, i32
  }
  func.func @transform_1(%arg0: i32) -> (i32, i32) {
    %c0_i32 = arith.constant 0 : i32
    %c0_i32_0 = arith.constant 0 : i32
    %c0_i32_1 = arith.constant 0 : i32
    return %c0_i32, %c0_i32_0 : i32, i32
  }
  func.func @transform_2(%arg0: i32) -> (i32, i32) {
    %c0_i32 = arith.constant 0 : i32
    %c0_i32_0 = arith.constant 0 : i32
    %c0_i32_1 = arith.constant 0 : i32
    return %c0_i32, %c0_i32_0 : i32, i32
  }
  func.func @transform_3(%arg0: i32) -> (i32, i32) {
    %c0_i32 = arith.constant 0 : i32
    %c0_i32_0 = arith.constant 0 : i32
    %c0_i32_1 = arith.constant 0 : i32
    return %c0_i32, %c0_i32_0 : i32, i32
  }
  func.func @transform_4(%arg0: i32) -> (i32, i32) {
    %c0_i32 = arith.constant 0 : i32
    %c0_i32_0 = arith.constant 0 : i32
    %c0_i32_1 = arith.constant 0 : i32
    return %c0_i32, %c0_i32_0 : i32, i32
  }
  func.func @transform_5(%arg0: i32) -> (i32, i32) {
    %c0_i32 = arith.constant 0 : i32
    %c0_i32_0 = arith.constant 0 : i32
    %c0_i32_1 = arith.constant 0 : i32
    return %c0_i32, %c0_i32_0 : i32, i32
  }
  func.func @transform_6(%arg0: i32) -> (i32, i32) {
    %c0_i32 = arith.constant 0 : i32
    %c0_i32_0 = arith.constant 0 : i32
    %c0_i32_1 = arith.constant 0 : i32
    return %c0_i32, %c0_i32_0 : i32, i32
  }
  func.func @transform_7(%arg0: i32) -> (i32, i32) {
    %c0_i32 = arith.constant 0 : i32
    %c0_i32_0 = arith.constant 0 : i32
    %c0_i32_1 = arith.constant 0 : i32
    return %c0_i32, %c0_i32_0 : i32, i32
  }
}

</mosaic_0001>

<llo_original>
// kernel: tpu_custom_call.1
$region0: #{tpu_custom_call.1}
  #allocation0 [shape = 'u32[]', space=smem, size = 0x4, offset = 0x4, fixed_abs, tag = 'smem constant byte address 0x4 - core index']
  #allocation1 [shape = 'u32[144,128]{1,0:T(1,128)}', space=vmem, size = 0x12000, scoped, tag = 'internal scratch']
  %s0 = inlined_call_operand.hbm [shape: f32[16,32], index: 0, kind: input, shape index: {}]
  %s1 = inlined_call_operand.vmem [shape: bf16[16,16], index: 1, kind: input, shape index: {}]
  %s2 = inlined_call_operand.vmem [shape: bf16[64,4], index: 2, kind: input, shape index: {}]
  %s3 = inlined_call_operand.vmem [shape: bf16[32,136], index: 3, kind: input, shape index: {}]
  %s4 = inlined_call_operand.vmem [shape: f32[1,128], index: 4, kind: input, shape index: {}]
  %s5 = inlined_call_operand.hbm [shape: bf16[32,136], index: 5, kind: input, shape index: {}]
  %s6 = inlined_call_operand.vmem [shape: f32[1,128], index: 6, kind: input, shape index: {}]
  %s7 = inlined_call_operand.hbm [shape: f32[16,32], index: 7, kind: output, shape index: {}]
  %s8 = sld [smem:[#allocation0]]
  $region46: #{tpu_custom_call.1} parent=0
    _
  %s10 = ssub.s32 1, %s8
  %s11 = scalar_select 0, %s10, %s8
  $region1: #{tpu_custom_call.1} parent=0
    #allocation2 [shape = 'u8[8192]{0}', space=vmem, size = 0x2000, scoped, tag = 'input window, operand 0, single buffered']
    #allocation3 [shape = 's32[1]{0}', space=sflag, size = 0x4, scoped, tag = 'scoped memory for tpu_custom_call.1']
    #allocation4 [shape = 's32[1]{0}', space=sflag, size = 0x4, scoped, tag = 'scoped memory for tpu_custom_call.1']
    #allocation5 [shape = 'u8[16384]{0}', space=vmem, size = 0x4000, scoped, tag = 'input window, operand 5, single buffered']
    #allocation6 [shape = 's32[1]{0}', space=sflag, size = 0x4, scoped, tag = 'scoped memory for tpu_custom_call.1']
    #allocation7 [shape = 'u8[8192]{0}', space=vmem, size = 0x2000, scoped, tag = 'output window, operand 0, single buffered']
    %12 = vsyncpa [#allocation3], 0
    %13 = vsyncpa [#allocation6], 0
    %14 = vsyncpa [#allocation4], 0
    // Predicated region
    $region2: #{tpu_custom_call.1} parent=1 // pred_check
      _
    $region3: #{tpu_custom_call.1} parent=1 // pred_check_branch
      %16 = sbr.rel (0) target = $region5
    $region4: #{tpu_custom_call.1} parent=1 // pred_region
      %s18 = ssub.s32 256, 256
      %19 = vsyncadd [#allocation3], %s18
      %s20 = sshll.u32 [#allocation2], 4
      %s21 = int_to_ptr.vmem [resolvable:$true] %s20
      %26 = dma.hbm_to_vmem [thread:$0]  %s0, 256, %s21, [#allocation3], 128, 128, 8
    $region5: #{tpu_custom_call.1} parent=1 // pred_fallthru
      _
    // Predicated region
    $region6: #{tpu_custom_call.1} parent=1 // pred_check
      _
    $region7: #{tpu_custom_call.1} parent=1 // pred_check_branch
      %28 = sbr.rel (0) target = $region9
    $region8: #{tpu_custom_call.1} parent=1 // pred_region
      _
    $region9: #{tpu_custom_call.1} parent=1 // pred_fallthru
      _
    // Predicated region
    $region10: #{tpu_custom_call.1} parent=1 // pred_check
      _
    $region11: #{tpu_custom_call.1} parent=1 // pred_check_branch
      %30 = sbr.rel (0) target = $region13
    $region12: #{tpu_custom_call.1} parent=1 // pred_region
      _
    $region13: #{tpu_custom_call.1} parent=1 // pred_fallthru
      _
    // Predicated region
    $region14: #{tpu_custom_call.1} parent=1 // pred_check
      _
    $region15: #{tpu_custom_call.1} parent=1 // pred_check_branch
      %32 = sbr.rel (0) target = $region17
    $region16: #{tpu_custom_call.1} parent=1 // pred_region
      _
    $region17: #{tpu_custom_call.1} parent=1 // pred_fallthru
      _
    // Predicated region
    $region18: #{tpu_custom_call.1} parent=1 // pred_check
      _
    $region19: #{tpu_custom_call.1} parent=1 // pred_check_branch
      %34 = sbr.rel (0) target = $region21
    $region20: #{tpu_custom_call.1} parent=1 // pred_region
      _
    $region21: #{tpu_custom_call.1} parent=1 // pred_fallthru
      _
    // Predicated region
    $region22: #{tpu_custom_call.1} parent=1 // pred_check
      _
    $region23: #{tpu_custom_call.1} parent=1 // pred_check_branch
      %36 = sbr.rel (0) target = $region25
    $region24: #{tpu_custom_call.1} parent=1 // pred_region
      %s38 = ssub.s32 512, 512
      %39 = vsyncadd [#allocation6], %s38
      %s40 = sshll.u32 [#allocation5], 4
      %s41 = int_to_ptr.vmem [resolvable:$true] %s40
      %46 = dma.hbm_to_vmem [thread:$0]  %s5, 512, %s41, [#allocation6], 128, 128, 8
    $region25: #{tpu_custom_call.1} parent=1 // pred_fallthru
      _
    // Predicated region
    $region26: #{tpu_custom_call.1} parent=1 // pred_check
      _
    $region27: #{tpu_custom_call.1} parent=1 // pred_check_branch
      %48 = sbr.rel (0) target = $region29
    $region28: #{tpu_custom_call.1} parent=1 // pred_region
      _
    $region29: #{tpu_custom_call.1} parent=1 // pred_fallthru
      _
    // Predicated region
    $region30: #{tpu_custom_call.1} parent=1 // pred_check
      _
    $region31: #{tpu_custom_call.1} parent=1 // pred_check_branch
      %50 = sbr.rel (0) target = $region33
    $region32: #{tpu_custom_call.1} parent=1 // pred_region
      %51 = dma.done [#allocation3], 256
    $region33: #{tpu_custom_call.1} parent=1 // pred_fallthru
      _
    // Predicated region
    $region34: #{tpu_custom_call.1} parent=1 // pred_check
      _
    $region35: #{tpu_custom_call.1} parent=1 // pred_check_branch
      %53 = sbr.rel (0) target = $region37
    $region36: #{tpu_custom_call.1} parent=1 // pred_region
      %54 = dma.done [#allocation6], 512
    $region37: #{tpu_custom_call.1} parent=1 // pred_fallthru
      _
    %v56 = vld [vmem:[#allocation2] sm:$0xff]
    %v57 = vld [vmem:[#allocation2 + $0x8] sm:$0xff]
    %v58 = vld [vmem:[%s1] sm:$0xf]
    %v59 = vld [vmem:[%s1 + $0x4] sm:$0xf]
    %v60 = vld [vmem:[%s2] sm:$0xf]
    %v61 = vld [vmem:[%s2 + $0x4] sm:$0xf]
    %v62 = vld [vmem:[%s2 + $0x8] sm:$0xf]
    %v63 = vld [vmem:[%s2 + $0xc] sm:$0xf]
    %v64 = vld [vmem:[%s2 + $0x10] sm:$0xf]
    %v65 = vld [vmem:[%s2 + $0x14] sm:$0xf]
    %v66 = vld [vmem:[%s2 + $0x18] sm:$0xf]
    %v67 = vld [vmem:[%s2 + $0x1c] sm:$0xf]
    %v68 = vunpack.c.l.bf16 %v58
    %v69 = vunpack.c.l.bf16 %v59
    %v70 = vsub.f32 %v68, 1.0
    %v71 = vsub.f32 %v69, 1.0
    %v72 = vmul.f32 %v70, 1e+30
    %v73 = vmul.f32 %v71, 1e+30
    %76 = vrot.lane.b32.xlu0 %v72, 16
    %v77 = vpop.permute.xlu0 %76
    %78 = vrot.lane.b32.xlu0 %v73, 16
    %v79 = vpop.permute.xlu0 %78
    %82 = vrot.lane.b32.xlu0 %v72, 32
    %v83 = vpop.permute.xlu0 %82
    %84 = vrot.lane.b32.xlu0 %v73, 32
    %v85 = vpop.permute.xlu0 %84
    %88 = vrot.lane.b32.xlu0 %v72, 48
    %v89 = vpop.permute.xlu0 %88
    %90 = vrot.lane.b32.xlu0 %v73, 48
    %v91 = vpop.permute.xlu0 %90
    %vm94 = vcmask 130048
    %v95 = vsel %vm94, %v72, %v77
    %v96 = vsel %vm94, %v73, %v79
    %vm97 = vcmask 261120
    %v98 = vsel %vm97, %v95, %v83
    %v99 = vsel %vm97, %v96, %v85
    %vm100 = vcmask 392192
    %v101 = vsel %vm100, %v98, %v89
    %v102 = vsel %vm100, %v99, %v91
    %v105 = vunpack.c.l.b16 %v58
    %v106 = vunpack.c.l.b16 %v59
    %v107 = vpack.c.b16 %v106, %v105
    %108 = vrot.lane.b32.xlu0 %v107, 16
    %v109 = vpop.permute.xlu0 %108
    %110 = vrot.lane.b32.xlu0 %v107, 32
    %v111 = vpop.permute.xlu0 %110
    %112 = vrot.lane.b32.xlu0 %v107, 48
    %v113 = vpop.permute.xlu0 %112
    %v116 = vsel %vm94, %v107, %v109
    %v118 = vsel %vm97, %v116, %v111
    %v120 = vsel %vm100, %v118, %v113
    %v122 = vld [vmem:[%s3] sm:$0xff]
    %v123 = vld [vmem:[%s3 + $0x8] sm:$0xff]
    %v124 = vld [vmem:[%s3 + $0x10] sm:$0xff]
    %v125 = vld [vmem:[%s3 + $0x18] sm:$0xff]
    %v126 = vld [vmem:[%s4] sm:$0x1]
    %v127 = vpack.c.bf16 %v57, %v56
    %v132 = vunpack.c.l.b16 %v122
    %v133 = vunpack.c.h.b16 %v122
    %v134 = vunpack.c.l.b16 %v123
    %v135 = vunpack.c.h.b16 %v123
    %v136 = vunpack.c.l.b16 %v124
    %v137 = vunpack.c.h.b16 %v124
    %v138 = vunpack.c.l.b16 %v125
    %v139 = vunpack.c.h.b16 %v125
    %v140 = vpack.c.b16 %v134, %v132
    %v141 = vpack.c.b16 %v135, %v133
    %v142 = vpack.c.b16 %v138, %v136
    %v143 = vpack.c.b16 %v139, %v137
    %v149 = vsel %vm97, %v127, 0
    %151 = vmatprep.subr.bf16.mxu0 %v141
    %152 = vmatpush1.bf16.msra.mxu0 %v140
    %153 = vmatprep.subr.bf16.mxu0 %v143
    %154 = vmatpush1.bf16.msra.mxu0 %v142
    %155 = vmatprep.subr.bf16.mxu0 0
    %156 = vmatpush1.bf16.msra.mxu0 0
    %157 = vmatprep.subr.bf16.mxu0 0
    %158 = vmatpush1.bf16.msra.mxu0 0
    %159 = vmatprep.subr.bf16.mxu0 0
    %160 = vmatpush1.bf16.msra.mxu0 0
    %161 = vmatprep.subr.bf16.mxu0 0
    %162 = vmatpush1.bf16.msra.mxu0 0
    %163 = vmatprep.subr.bf16.mxu0 0
    %164 = vmatpush1.bf16.msra.mxu0 0
    %165 = vmatprep.subr.bf16.mxu0 0
    %166 = vmatpush1.bf16.msra.mxu0 0
    %167 = vmatprep.subr.bf16.mxu0 0
    %168 = vmatpush1.bf16.msra.mxu0 0
    %169 = vmatprep.subr.bf16.mxu0 0
    %170 = vmatpush1.bf16.msra.mxu0 0
    %171 = vmatprep.subr.bf16.mxu0 0
    %172 = vmatpush1.bf16.msra.mxu0 0
    %173 = vmatprep.subr.bf16.mxu0 0
    %174 = vmatpush1.bf16.msra.mxu0 0
    %175 = vmatprep.subr.bf16.mxu0 0
    %176 = vmatpush1.bf16.msra.mxu0 0
    %177 = vmatprep.subr.bf16.mxu0 0
    %178 = vmatpush1.bf16.msra.mxu0 0
    %179 = vmatprep.subr.bf16.mxu0 0
    %180 = vmatpush1.bf16.msra.mxu0 0
    %181 = vmatprep.subr.bf16.mxu0 0
    %182 = vmatpush1.bf16.msra.mxu0 0
    %183 = vmatprep.mubr.bf16.mxu0 0
    %184 = vmatmul.mubr.bf16.gmra.mrb[0].mxu0 %v149
    %v185 = vpop.f32.mrb[0].mxu0
    %v186 = vadd.f32 0.0, %v185
    %v187 = vpop.f32.mrb[0].mxu0
    %v188 = vadd.f32 0.0, %v187
    %v189 = vpop.f32.mrb[0].mxu0
    %v190 = vadd.f32 0.0, %v189
    %v191 = vpop.f32.mrb[0].mxu0
    %v192 = vadd.f32 0.0, %v191
    %193 = vdwg.mxu0
    %194 = vxpose.xlu0.b32.start [1/16] %v188, 128
    %195 = vxpose.xlu0.b32.cont [2/16] %v192, 128
    %196 = vxpose.xlu0.b32.cont [3/16] 0.0, 128
    %197 = vxpose.xlu0.b32.cont [4/16] 0.0, 128
    %198 = vxpose.xlu0.b32.cont [5/16] 0.0, 128
    %199 = vxpose.xlu0.b32.cont [6/16] 0.0, 128
    %200 = vxpose.xlu0.b32.cont [7/16] 0.0, 128
    %201 = vxpose.xlu0.b32.cont [8/16] 0.0, 128
    %202 = vxpose.xlu0.b32.cont [9/16] 0.0, 128
    %203 = vxpose.xlu0.b32.cont [10/16] 0.0, 128
    %204 = vxpose.xlu0.b32.cont [11/16] 0.0, 128
    %205 = vxpose.xlu0.b32.cont [12/16] 0.0, 128
    %206 = vxpose.xlu0.b32.cont [13/16] 0.0, 128
    %207 = vxpose.xlu0.b32.cont [14/16] 0.0, 128
    %208 = vxpose.xlu0.b32.cont [15/16] 0.0, 128
    %209 = vxpose.xlu0.b32.end [16/16] 0.0, 128
    %v210 = vpop.trf.xlu0
    %v211 = vpop.trf.xlu0
    %v212 = vpop.trf.xlu0
    %v213 = vpop.trf.xlu0
    %v214 = vpop.trf.xlu0
    %v215 = vpop.trf.xlu0
    %v216 = vpop.trf.xlu0
    %v217 = vpop.trf.xlu0
    %v218 = vpop.trf.xlu0
    %v219 = vpop.trf.xlu0
    %v220 = vpop.trf.xlu0
    %v221 = vpop.trf.xlu0
    %v222 = vpop.trf.xlu0
    %v223 = vpop.trf.xlu0
    %v224 = vpop.trf.xlu0
    %v225 = vpop.trf.xlu0
    %227 = vset.pattern.permute.xlu0 4
    %228 = vperm.xlu0 %227, %v188
    %v229 = vpop.permute.xlu0 %228
    %232 = vset.pattern.permute.xlu0 4
    %233 = vperm.xlu0 %232, %v192
    %v234 = vpop.permute.xlu0 %233
    %v236 = vlaneseq
    %v237 = vshrl.u32 %v236, 7
    %v238 = vsub.s32 0, %v237
    %v239 = vrot.slane %v210, %v238
    %v240 = vadd.f32 %v229, %v239
    %v241 = vadd.f32 %v234, %v239
    %242 = vset.pattern.permute.xlu0 5
    %243 = vperm.xlu0 %242, %v188
    %v244 = vpop.permute.xlu0 %243
    %246 = vset.pattern.permute.xlu0 5
    %247 = vperm.xlu0 %246, %v192
    %v248 = vpop.permute.xlu0 %247
    %v250 = vlaneseq
    %v251 = vshrl.u32 %v250, 7
    %v252 = vsub.s32 1, %v251
    %v253 = vrot.slane %v210, %v252
    %v254 = vadd.f32 %v244, %v253
    %v255 = vadd.f32 %v248, %v253
    %256 = vset.pattern.permute.xlu0 6
    %257 = vperm.xlu0 %256, %v188
    %v258 = vpop.permute.xlu0 %257
    %260 = vset.pattern.permute.xlu0 6
    %261 = vperm.xlu0 %260, %v192
    %v262 = vpop.permute.xlu0 %261
    %v264 = vlaneseq
    %v265 = vshrl.u32 %v264, 7
    %v266 = vsub.s32 2, %v265
    %v267 = vrot.slane %v210, %v266
    %v268 = vadd.f32 %v258, %v267
    %v269 = vadd.f32 %v262, %v267
    %270 = vset.pattern.permute.xlu0 7
    %271 = vperm.xlu0 %270, %v188
    %v272 = vpop.permute.xlu0 %271
    %274 = vset.pattern.permute.xlu0 7
    %275 = vperm.xlu0 %274, %v192
    %v276 = vpop.permute.xlu0 %275
    %v278 = vlaneseq
    %v279 = vshrl.u32 %v278, 7
    %v280 = vsub.s32 3, %v279
    %v281 = vrot.slane %v210, %v280
    %v282 = vadd.f32 %v272, %v281
    %v283 = vadd.f32 %v276, %v281
    %286 = vrot.lane.b32.xlu0 %v254, 16
    %v287 = vpop.permute.xlu0 %286
    %288 = vrot.lane.b32.xlu0 %v255, 16
    %v289 = vpop.permute.xlu0 %288
    %294 = vrot.lane.b32.xlu0 %v268, 32
    %v295 = vpop.permute.xlu0 %294
    %296 = vrot.lane.b32.xlu0 %v269, 32
    %v297 = vpop.permute.xlu0 %296
    %302 = vrot.lane.b32.xlu0 %v282, 48
    %v303 = vpop.permute.xlu0 %302
    %304 = vrot.lane.b32.xlu0 %v283, 48
    %v305 = vpop.permute.xlu0 %304
    %v308 = vsel %vm94, %v240, %v287
    %v309 = vsel %vm94, %v241, %v289
    %v310 = vsel %vm97, %v308, %v295
    %v311 = vsel %vm97, %v309, %v297
    %v312 = vsel %vm100, %v310, %v303
    %v313 = vsel %vm100, %v311, %v305
    %v314 = vmul.f32 %v312, 0.2
    %v315 = vmul.f32 %v313, 0.2
    %v316 = vmax.f32 %v312, %v314
    %v317 = vmax.f32 %v313, %v315
    %v318 = vadd.f32 %v316, %v101
    %v319 = vadd.f32 %v317, %v102
    %vm320 = vcmask 523264
    %v321 = vsel %vm320, %v318, -inf
    %322 = vmax.xlane.f32.xlu0 %v321
    %v323 = vpop.xlane.xlu0 %322
    %v324 = vsel %vm320, %v319, -inf
    %325 = vmax.xlane.f32.xlu0 %v324
    %v326 = vpop.xlane.xlu0 %325
    %v327 = vsub.f32 %v318, %v323
    %v328 = vsub.f32 %v319, %v326
    %v329 = vpack.c.bf16 %v328, %v327
    %v331 = vmul.bf16 %v329, 1069105081
    %v332 = vpow.bf16.pop %v331
    %v333 = vmul.bf16 %v332, %v120
    %v342 = vunpack.c.l.b16 %v60
    %v343 = vunpack.c.l.b16 %v61
    %v344 = vunpack.c.l.b16 %v62
    %v345 = vunpack.c.l.b16 %v63
    %v346 = vunpack.c.l.b16 %v64
    %v347 = vunpack.c.l.b16 %v65
    %v348 = vunpack.c.l.b16 %v66
    %v349 = vunpack.c.l.b16 %v67
    %v350 = vpack.c.b16 %v343, %v342
    %v351 = vpack.c.b16 %v345, %v344
    %v352 = vpack.c.b16 %v347, %v346
    %v353 = vpack.c.b16 %v349, %v348
    %v359 = vsel %vm320, %v333, 0
    %361 = vmatprep.subr.bf16.mxu0 0
    %362 = vmatpush1.bf16.msra.mxu0 %v350
    %363 = vmatprep.subr.bf16.mxu0 0
    %364 = vmatpush1.bf16.msra.mxu0 %v351
    %365 = vmatprep.subr.bf16.mxu0 0
    %366 = vmatpush1.bf16.msra.mxu0 %v352
    %367 = vmatprep.subr.bf16.mxu0 0
    %368 = vmatpush1.bf16.msra.mxu0 %v353
    %369 = vmatprep.subr.bf16.mxu0 0
    %370 = vmatpush1.bf16.msra.mxu0 0
    %371 = vmatprep.subr.bf16.mxu0 0
    %372 = vmatpush1.bf16.msra.mxu0 0
    %373 = vmatprep.subr.bf16.mxu0 0
    %374 = vmatpush1.bf16.msra.mxu0 0
    %375 = vmatprep.subr.bf16.mxu0 0
    %376 = vmatpush1.bf16.msra.mxu0 0
    %377 = vmatprep.subr.bf16.mxu0 0
    %378 = vmatpush1.bf16.msra.mxu0 0
    %379 = vmatprep.subr.bf16.mxu0 0
    %380 = vmatpush1.bf16.msra.mxu0 0
    %381 = vmatprep.subr.bf16.mxu0 0
    %382 = vmatpush1.bf16.msra.mxu0 0
    %383 = vmatprep.subr.bf16.mxu0 0
    %384 = vmatpush1.bf16.msra.mxu0 0
    %385 = vmatprep.subr.bf16.mxu0 0
    %386 = vmatpush1.bf16.msra.mxu0 0
    %387 = vmatprep.subr.bf16.mxu0 0
    %388 = vmatpush1.bf16.msra.mxu0 0
    %389 = vmatprep.subr.bf16.mxu0 0
    %390 = vmatpush1.bf16.msra.mxu0 0
    %391 = vmatprep.subr.bf16.mxu0 0
    %392 = vmatpush1.bf16.msra.mxu0 0
    %393 = vmatprep.mubr.bf16.mxu0 0
    %394 = vmatmul.mubr.bf16.gmra.mrb[0].mxu0 %v359
    %v395 = vpop.f32.mrb[0].mxu0
    %v396 = vadd.f32 0.0, %v395
    %v397 = vpop.f32.mrb[0].mxu0
    %v398 = vpop.f32.mrb[0].mxu0
    %v399 = vadd.f32 0.0, %v398
    %v400 = vpop.f32.mrb[0].mxu0
    %401 = vdwg.mxu0
    %v402 = vmax.f32 %v396, 1e-12
    %v403 = vmax.f32 %v399, 1e-12
    %v404 = vrcp.pop %v402
    %v405 = vrcp.pop %v403
    %v406 = vpack.c.bf16 %v190, %v186
    %v407 = vsel %vm94, %v333, 0
    %409 = vmatprep.subr.bf16.mxu0 0
    %410 = vmatpush1.bf16.msra.mxu0 %v406
    %411 = vmatprep.subr.bf16.mxu0 0
    %412 = vmatpush1.bf16.msra.mxu0 0
    %413 = vmatprep.subr.bf16.mxu0 0
    %414 = vmatpush1.bf16.msra.mxu0 0
    %415 = vmatprep.subr.bf16.mxu0 0
    %416 = vmatpush1.bf16.msra.mxu0 0
    %417 = vmatprep.subr.bf16.mxu0 0
    %418 = vmatpush1.bf16.msra.mxu0 0
    %419 = vmatprep.subr.bf16.mxu0 0
    %420 = vmatpush1.bf16.msra.mxu0 0
    %421 = vmatprep.subr.bf16.mxu0 0
    %422 = vmatpush1.bf16.msra.mxu0 0
    %423 = vmatprep.subr.bf16.mxu0 0
    %424 = vmatpush1.bf16.msra.mxu0 0
    %425 = vmatprep.subr.bf16.mxu0 0
    %426 = vmatpush1.bf16.msra.mxu0 0
    %427 = vmatprep.subr.bf16.mxu0 0
    %428 = vmatpush1.bf16.msra.mxu0 0
    %429 = vmatprep.subr.bf16.mxu0 0
    %430 = vmatpush1.bf16.msra.mxu0 0
    %431 = vmatprep.subr.bf16.mxu0 0
    %432 = vmatpush1.bf16.msra.mxu0 0
    %433 = vmatprep.subr.bf16.mxu0 0
    %434 = vmatpush1.bf16.msra.mxu0 0
    %435 = vmatprep.subr.bf16.mxu0 0
    %436 = vmatpush1.bf16.msra.mxu0 0
    %437 = vmatprep.subr.bf16.mxu0 0
    %438 = vmatpush1.bf16.msra.mxu0 0
    %439 = vmatprep.subr.bf16.mxu0 0
    %440 = vmatpush1.bf16.msra.mxu0 0
    %441 = vmatprep.mubr.bf16.mxu0 0
    %442 = vmatmul.mubr.bf16.gmra.mrb[0].mxu0 %v407
    %v443 = vpop.f32.mrb[0].mxu0
    %v444 = vadd.f32 0.0, %v443
    %v445 = vpop.f32.mrb[0].mxu0
    %v446 = vpop.f32.mrb[0].mxu0
    %v447 = vadd.f32 0.0, %v446
    %v448 = vpop.f32.mrb[0].mxu0
    %449 = vdwg.mxu0
    %451 = vset.pattern.permute.xlu0 0
    %452 = vperm.xlu0 %451, %v404
    %v453 = vpop.permute.xlu0 %452
    %456 = vset.pattern.permute.xlu0 0
    %457 = vperm.xlu0 %456, %v405
    %v458 = vpop.permute.xlu0 %457
    %v460 = vmul.f32 %v444, %v453
    %v461 = vmul.f32 %v447, %v458
    %v463 = vlaneseq
    %v464 = vshrl.u32 %v463, 7
    %v465 = vsub.s32 0, %v464
    %v466 = vrot.slane %v126, %v465
    %v468 = vadd.f32 %v460, %v466
    %v469 = vadd.f32 %v461, %v466
    %v470 = vmax.f32 %v468, 0.0
    %v471 = vmax.f32 %v469, 0.0
    %473 = vrot.lane.b32.xlu0 %v333, 112
    %v474 = vpop.permute.xlu0 %473
    %476 = vrot.lane.b32.xlu0 %v406, 96
    %v477 = vpop.permute.xlu0 %476
    %v480 = vsel %vm94, %v474, 0
    %482 = vmatprep.subr.bf16.mxu0 0
    %483 = vmatpush1.bf16.msra.mxu0 %v477
    %484 = vmatprep.subr.bf16.mxu0 0
    %485 = vmatpush1.bf16.msra.mxu0 0
    %486 = vmatprep.subr.bf16.mxu0 0
    %487 = vmatpush1.bf16.msra.mxu0 0
    %488 = vmatprep.subr.bf16.mxu0 0
    %489 = vmatpush1.bf16.msra.mxu0 0
    %490 = vmatprep.subr.bf16.mxu0 0
    %491 = vmatpush1.bf16.msra.mxu0 0
    %492 = vmatprep.subr.bf16.mxu0 0
    %493 = vmatpush1.bf16.msra.mxu0 0
    %494 = vmatprep.subr.bf16.mxu0 0
    %495 = vmatpush1.bf16.msra.mxu0 0
    %496 = vmatprep.subr.bf16.mxu0 0
    %497 = vmatpush1.bf16.msra.mxu0 0
    %498 = vmatprep.subr.bf16.mxu0 0
    %499 = vmatpush1.bf16.msra.mxu0 0
    %500 = vmatprep.subr.bf16.mxu0 0
    %501 = vmatpush1.bf16.msra.mxu0 0
    %502 = vmatprep.subr.bf16.mxu0 0
    %503 = vmatpush1.bf16.msra.mxu0 0
    %504 = vmatprep.subr.bf16.mxu0 0
    %505 = vmatpush1.bf16.msra.mxu0 0
    %506 = vmatprep.subr.bf16.mxu0 0
    %507 = vmatpush1.bf16.msra.mxu0 0
    %508 = vmatprep.subr.bf16.mxu0 0
    %509 = vmatpush1.bf16.msra.mxu0 0
    %510 = vmatprep.subr.bf16.mxu0 0
    %511 = vmatpush1.bf16.msra.mxu0 0
    %512 = vmatprep.subr.bf16.mxu0 0
    %513 = vmatpush1.bf16.msra.mxu0 0
    %514 = vmatprep.mubr.bf16.mxu0 0
    %515 = vmatmul.mubr.bf16.gmra.mrb[0].mxu0 %v480
    %v516 = vpop.f32.mrb[0].mxu0
    %v517 = vadd.f32 0.0, %v516
    %v518 = vpop.f32.mrb[0].mxu0
    %v519 = vpop.f32.mrb[0].mxu0
    %v520 = vadd.f32 0.0, %v519
    %v521 = vpop.f32.mrb[0].mxu0
    %522 = vdwg.mxu0
    %523 = vset.pattern.permute.xlu0 1
    %524 = vperm.xlu0 %523, %v404
    %v525 = vpop.permute.xlu0 %524
    %527 = vset.pattern.permute.xlu0 1
    %528 = vperm.xlu0 %527, %v405
    %v529 = vpop.permute.xlu0 %528
    %v531 = vmul.f32 %v517, %v525
    %v532 = vmul.f32 %v520, %v529
    %533 = vrot.lane.b32.xlu0 %v466, 96
    %v534 = vpop.permute.xlu0 %533
    %v536 = vadd.f32 %v531, %v534
    %v537 = vadd.f32 %v532, %v534
    %v538 = vmax.f32 %v536, 0.0
    %v539 = vmax.f32 %v537, 0.0
    %v540 = vadd.f32 %v470, %v538
    %v541 = vadd.f32 %v471, %v539
    %542 = vrot.lane.b32.xlu0 %v333, 96
    %v543 = vpop.permute.xlu0 %542
    %544 = vrot.lane.b32.xlu0 %v406, 64
    %v545 = vpop.permute.xlu0 %544
    %v548 = vsel %vm94, %v543, 0
    %550 = vmatprep.subr.bf16.mxu0 0
    %551 = vmatpush1.bf16.msra.mxu0 %v545
    %552 = vmatprep.subr.bf16.mxu0 0
    %553 = vmatpush1.bf16.msra.mxu0 0
    %554 = vmatprep.subr.bf16.mxu0 0
    %555 = vmatpush1.bf16.msra.mxu0 0
    %556 = vmatprep.subr.bf16.mxu0 0
    %557 = vmatpush1.bf16.msra.mxu0 0
    %558 = vmatprep.subr.bf16.mxu0 0
    %559 = vmatpush1.bf16.msra.mxu0 0
    %560 = vmatprep.subr.bf16.mxu0 0
    %561 = vmatpush1.bf16.msra.mxu0 0
    %562 = vmatprep.subr.bf16.mxu0 0
    %563 = vmatpush1.bf16.msra.mxu0 0
    %564 = vmatprep.subr.bf16.mxu0 0
    %565 = vmatpush1.bf16.msra.mxu0 0
    %566 = vmatprep.subr.bf16.mxu0 0
    %567 = vmatpush1.bf16.msra.mxu0 0
    %568 = vmatprep.subr.bf16.mxu0 0
    %569 = vmatpush1.bf16.msra.mxu0 0
    %570 = vmatprep.subr.bf16.mxu0 0
    %571 = vmatpush1.bf16.msra.mxu0 0
    %572 = vmatprep.subr.bf16.mxu0 0
    %573 = vmatpush1.bf16.msra.mxu0 0
    %574 = vmatprep.subr.bf16.mxu0 0
    %575 = vmatpush1.bf16.msra.mxu0 0
    %576 = vmatprep.subr.bf16.mxu0 0
    %577 = vmatpush1.bf16.msra.mxu0 0
    %578 = vmatprep.subr.bf16.mxu0 0
    %579 = vmatpush1.bf16.msra.mxu0 0
    %580 = vmatprep.subr.bf16.mxu0 0
    %581 = vmatpush1.bf16.msra.mxu0 0
    %582 = vmatprep.mubr.bf16.mxu0 0
    %583 = vmatmul.mubr.bf16.gmra.mrb[0].mxu0 %v548
    %v584 = vpop.f32.mrb[0].mxu0
    %v585 = vadd.f32 0.0, %v584
    %v586 = vpop.f32.mrb[0].mxu0
    %v587 = vpop.f32.mrb[0].mxu0
    %v588 = vadd.f32 0.0, %v587
    %v589 = vpop.f32.mrb[0].mxu0
    %590 = vdwg.mxu0
    %591 = vset.pattern.permute.xlu0 2
    %592 = vperm.xlu0 %591, %v404
    %v593 = vpop.permute.xlu0 %592
    %595 = vset.pattern.permute.xlu0 2
    %596 = vperm.xlu0 %595, %v405
    %v597 = vpop.permute.xlu0 %596
    %v599 = vmul.f32 %v585, %v593
    %v600 = vmul.f32 %v588, %v597
    %601 = vrot.lane.b32.xlu0 %v466, 64
    %v602 = vpop.permute.xlu0 %601
    %v604 = vadd.f32 %v599, %v602
    %v605 = vadd.f32 %v600, %v602
    %v606 = vmax.f32 %v604, 0.0
    %v607 = vmax.f32 %v605, 0.0
    %v608 = vadd.f32 %v540, %v606
    %v609 = vadd.f32 %v541, %v607
    %610 = vrot.lane.b32.xlu0 %v333, 80
    %v611 = vpop.permute.xlu0 %610
    %612 = vrot.lane.b32.xlu0 %v406, 32
    %v613 = vpop.permute.xlu0 %612
    %v616 = vsel %vm94, %v611, 0
    %618 = vmatprep.subr.bf16.mxu0 0
    %619 = vmatpush1.bf16.msra.mxu0 %v613
    %620 = vmatprep.subr.bf16.mxu0 0
    %621 = vmatpush1.bf16.msra.mxu0 0
    %622 = vmatprep.subr.bf16.mxu0 0
    %623 = vmatpush1.bf16.msra.mxu0 0
    %624 = vmatprep.subr.bf16.mxu0 0
    %625 = vmatpush1.bf16.msra.mxu0 0
    %626 = vmatprep.subr.bf16.mxu0 0
    %627 = vmatpush1.bf16.msra.mxu0 0
    %628 = vmatprep.subr.bf16.mxu0 0
    %629 = vmatpush1.bf16.msra.mxu0 0
    %630 = vmatprep.subr.bf16.mxu0 0
    %631 = vmatpush1.bf16.msra.mxu0 0
    %632 = vmatprep.subr.bf16.mxu0 0
    %633 = vmatpush1.bf16.msra.mxu0 0
    %634 = vmatprep.subr.bf16.mxu0 0
    %635 = vmatpush1.bf16.msra.mxu0 0
    %636 = vmatprep.subr.bf16.mxu0 0
    %637 = vmatpush1.bf16.msra.mxu0 0
    %638 = vmatprep.subr.bf16.mxu0 0
    %639 = vmatpush1.bf16.msra.mxu0 0
    %640 = vmatprep.subr.bf16.mxu0 0
    %641 = vmatpush1.bf16.msra.mxu0 0
    %642 = vmatprep.subr.bf16.mxu0 0
    %643 = vmatpush1.bf16.msra.mxu0 0
    %644 = vmatprep.subr.bf16.mxu0 0
    %645 = vmatpush1.bf16.msra.mxu0 0
    %646 = vmatprep.subr.bf16.mxu0 0
    %647 = vmatpush1.bf16.msra.mxu0 0
    %648 = vmatprep.subr.bf16.mxu0 0
    %649 = vmatpush1.bf16.msra.mxu0 0
    %650 = vmatprep.mubr.bf16.mxu0 0
    %651 = vmatmul.mubr.bf16.gmra.mrb[0].mxu0 %v616
    %v652 = vpop.f32.mrb[0].mxu0
    %v653 = vadd.f32 0.0, %v652
    %v654 = vpop.f32.mrb[0].mxu0
    %v655 = vpop.f32.mrb[0].mxu0
    %v656 = vadd.f32 0.0, %v655
    %v657 = vpop.f32.mrb[0].mxu0
    %658 = vdwg.mxu0
    %659 = vset.pattern.permute.xlu0 3
    %660 = vperm.xlu0 %659, %v404
    %v661 = vpop.permute.xlu0 %660
    %663 = vset.pattern.permute.xlu0 3
    %664 = vperm.xlu0 %663, %v405
    %v665 = vpop.permute.xlu0 %664
    %v667 = vmul.f32 %v653, %v661
    %v668 = vmul.f32 %v656, %v665
    %669 = vrot.lane.b32.xlu0 %v466, 32
    %v670 = vpop.permute.xlu0 %669
    %v672 = vadd.f32 %v667, %v670
    %v673 = vadd.f32 %v668, %v670
    %v674 = vmax.f32 %v672, 0.0
    %v675 = vmax.f32 %v673, 0.0
    %v676 = vadd.f32 %v608, %v674
    %v677 = vadd.f32 %v609, %v675
    %v678 = vmul.f32 %v676, 0.25
    %v679 = vmul.f32 %v677, 0.25
    %v680 = vld [vmem:[#allocation5] sm:$0xff]
    %v681 = vld [vmem:[#allocation5 + $0x8] sm:$0xff]
    %v682 = vld [vmem:[#allocation5 + $0x10] sm:$0xff]
    %v683 = vld [vmem:[#allocation5 + $0x18] sm:$0xff]
    %v684 = vld [vmem:[%s6] sm:$0x1]
    %v685 = vpack.c.bf16 %v679, %v678
    %v690 = vunpack.c.l.b16 %v680
    %v691 = vunpack.c.h.b16 %v680
    %v692 = vunpack.c.l.b16 %v681
    %v693 = vunpack.c.h.b16 %v681
    %v694 = vunpack.c.l.b16 %v682
    %v695 = vunpack.c.h.b16 %v682
    %v696 = vunpack.c.l.b16 %v683
    %v697 = vunpack.c.h.b16 %v683
    %v698 = vpack.c.b16 %v692, %v690
    %v699 = vpack.c.b16 %v693, %v691
    %v700 = vpack.c.b16 %v696, %v694
    %v701 = vpack.c.b16 %v697, %v695
    %v707 = vsel %vm97, %v685, 0
    %709 = vmatprep.subr.bf16.mxu0 %v699
    %710 = vmatpush1.bf16.msra.mxu0 %v698
    %711 = vmatprep.subr.bf16.mxu0 %v701
    %712 = vmatpush1.bf16.msra.mxu0 %v700
    %713 = vmatprep.subr.bf16.mxu0 0
    %714 = vmatpush1.bf16.msra.mxu0 0
    %715 = vmatprep.subr.bf16.mxu0 0
    %716 = vmatpush1.bf16.msra.mxu0 0
    %717 = vmatprep.subr.bf16.mxu0 0
    %718 = vmatpush1.bf16.msra.mxu0 0
    %719 = vmatprep.subr.bf16.mxu0 0
    %720 = vmatpush1.bf16.msra.mxu0 0
    %721 = vmatprep.subr.bf16.mxu0 0
    %722 = vmatpush1.bf16.msra.mxu0 0
    %723 = vmatprep.subr.bf16.mxu0 0
    %724 = vmatpush1.bf16.msra.mxu0 0
    %725 = vmatprep.subr.bf16.mxu0 0
    %726 = vmatpush1.bf16.msra.mxu0 0
    %727 = vmatprep.subr.bf16.mxu0 0
    %728 = vmatpush1.bf16.msra.mxu0 0
    %729 = vmatprep.subr.bf16.mxu0 0
    %730 = vmatpush1.bf16.msra.mxu0 0
    %731 = vmatprep.subr.bf16.mxu0 0
    %732 = vmatpush1.bf16.msra.mxu0 0
    %733 = vmatprep.subr.bf16.mxu0 0
    %734 = vmatpush1.bf16.msra.mxu0 0
    %735 = vmatprep.subr.bf16.mxu0 0
    %736 = vmatpush1.bf16.msra.mxu0 0
    %737 = vmatprep.subr.bf16.mxu0 0
    %738 = vmatpush1.bf16.msra.mxu0 0
    %739 = vmatprep.subr.bf16.mxu0 0
    %740 = vmatpush1.bf16.msra.mxu0 0
    %741 = vmatprep.mubr.bf16.mxu0 0
    %742 = vmatmul.mubr.bf16.gmra.mrb[0].mxu0 %v707
    %v743 = vpop.f32.mrb[0].mxu0
    %v744 = vadd.f32 0.0, %v743
    %v745 = vpop.f32.mrb[0].mxu0
    %v746 = vadd.f32 0.0, %v745
    %v747 = vpop.f32.mrb[0].mxu0
    %v748 = vadd.f32 0.0, %v747
    %v749 = vpop.f32.mrb[0].mxu0
    %v750 = vadd.f32 0.0, %v749
    %751 = vdwg.mxu0
    %752 = vxpose.xlu0.b32.start [1/16] %v746, 128
    %753 = vxpose.xlu0.b32.cont [2/16] %v750, 128
    %754 = vxpose.xlu0.b32.cont [3/16] 0.0, 128
    %755 = vxpose.xlu0.b32.cont [4/16] 0.0, 128
    %756 = vxpose.xlu0.b32.cont [5/16] 0.0, 128
    %757 = vxpose.xlu0.b32.cont [6/16] 0.0, 128
    %758 = vxpose.xlu0.b32.cont [7/16] 0.0, 128
    %759 = vxpose.xlu0.b32.cont [8/16] 0.0, 128
    %760 = vxpose.xlu0.b32.cont [9/16] 0.0, 128
    %761 = vxpose.xlu0.b32.cont [10/16] 0.0, 128
    %762 = vxpose.xlu0.b32.cont [11/16] 0.0, 128
    %763 = vxpose.xlu0.b32.cont [12/16] 0.0, 128
    %764 = vxpose.xlu0.b32.cont [13/16] 0.0, 128
    %765 = vxpose.xlu0.b32.cont [14/16] 0.0, 128
    %766 = vxpose.xlu0.b32.cont [15/16] 0.0, 128
    %767 = vxpose.xlu0.b32.end [16/16] 0.0, 128
    %v768 = vpop.trf.xlu0
    %v769 = vpop.trf.xlu0
    %v770 = vpop.trf.xlu0
    %v771 = vpop.trf.xlu0
    %v772 = vpop.trf.xlu0
    %v773 = vpop.trf.xlu0
    %v774 = vpop.trf.xlu0
    %v775 = vpop.trf.xlu0
    %v776 = vpop.trf.xlu0
    %v777 = vpop.trf.xlu0
    %v778 = vpop.trf.xlu0
    %v779 = vpop.trf.xlu0
    %v780 = vpop.trf.xlu0
    %v781 = vpop.trf.xlu0
    %v782 = vpop.trf.xlu0
    %v783 = vpop.trf.xlu0
    %785 = vset.pattern.permute.xlu0 4
    %786 = vperm.xlu0 %785, %v746
    %v787 = vpop.permute.xlu0 %786
    %790 = vset.pattern.permute.xlu0 4
    %791 = vperm.xlu0 %790, %v750
    %v792 = vpop.permute.xlu0 %791
    %v794 = vlaneseq
    %v795 = vshrl.u32 %v794, 7
    %v796 = vsub.s32 0, %v795
    %v797 = vrot.slane %v768, %v796
    %v798 = vadd.f32 %v787, %v797
    %v799 = vadd.f32 %v792, %v797
    %800 = vset.pattern.permute.xlu0 5
    %801 = vperm.xlu0 %800, %v746
    %v802 = vpop.permute.xlu0 %801
    %804 = vset.pattern.permute.xlu0 5
    %805 = vperm.xlu0 %804, %v750
    %v806 = vpop.permute.xlu0 %805
    %v808 = vlaneseq
    %v809 = vshrl.u32 %v808, 7
    %v810 = vsub.s32 1, %v809
    %v811 = vrot.slane %v768, %v810
    %v812 = vadd.f32 %v802, %v811
    %v813 = vadd.f32 %v806, %v811
    %814 = vset.pattern.permute.xlu0 6
    %815 = vperm.xlu0 %814, %v746
    %v816 = vpop.permute.xlu0 %815
    %818 = vset.pattern.permute.xlu0 6
    %819 = vperm.xlu0 %818, %v750
    %v820 = vpop.permute.xlu0 %819
    %v822 = vlaneseq
    %v823 = vshrl.u32 %v822, 7
    %v824 = vsub.s32 2, %v823
    %v825 = vrot.slane %v768, %v824
    %v826 = vadd.f32 %v816, %v825
    %v827 = vadd.f32 %v820, %v825
    %828 = vset.pattern.permute.xlu0 7
    %829 = vperm.xlu0 %828, %v746
    %v830 = vpop.permute.xlu0 %829
    %832 = vset.pattern.permute.xlu0 7
    %833 = vperm.xlu0 %832, %v750
    %v834 = vpop.permute.xlu0 %833
    %v836 = vlaneseq
    %v837 = vshrl.u32 %v836, 7
    %v838 = vsub.s32 3, %v837
    %v839 = vrot.slane %v768, %v838
    %v840 = vadd.f32 %v830, %v839
    %v841 = vadd.f32 %v834, %v839
    %844 = vrot.lane.b32.xlu0 %v812, 16
    %v845 = vpop.permute.xlu0 %844
    %846 = vrot.lane.b32.xlu0 %v813, 16
    %v847 = vpop.permute.xlu0 %846
    %852 = vrot.lane.b32.xlu0 %v826, 32
    %v853 = vpop.permute.xlu0 %852
    %854 = vrot.lane.b32.xlu0 %v827, 32
    %v855 = vpop.permute.xlu0 %854
    %860 = vrot.lane.b32.xlu0 %v840, 48
    %v861 = vpop.permute.xlu0 %860
    %862 = vrot.lane.b32.xlu0 %v841, 48
    %v863 = vpop.permute.xlu0 %862
    %v866 = vsel %vm94, %v798, %v845
    %v867 = vsel %vm94, %v799, %v847
    %v868 = vsel %vm97, %v866, %v853
    %v869 = vsel %vm97, %v867, %v855
    %v870 = vsel %vm100, %v868, %v861
    %v871 = vsel %vm100, %v869, %v863
    %v872 = vmul.f32 %v870, 0.2
    %v873 = vmul.f32 %v871, 0.2
    %v874 = vmax.f32 %v870, %v872
    %v875 = vmax.f32 %v871, %v873
    %v876 = vadd.f32 %v874, %v101
    %v877 = vadd.f32 %v875, %v102
    %v878 = vsel %vm320, %v876, -inf
    %879 = vmax.xlane.f32.xlu0 %v878
    %v880 = vpop.xlane.xlu0 %879
    %v881 = vsel %vm320, %v877, -inf
    %882 = vmax.xlane.f32.xlu0 %v881
    %v883 = vpop.xlane.xlu0 %882
    %v884 = vsub.f32 %v876, %v880
    %v885 = vsub.f32 %v877, %v883
    %v886 = vpack.c.bf16 %v885, %v884
    %v888 = vmul.bf16 %v886, 1069105081
    %v889 = vpow.bf16.pop %v888
    %v890 = vmul.bf16 %v889, %v120
    %v892 = vsel %vm320, %v890, 0
    %894 = vmatprep.subr.bf16.mxu0 0
    %895 = vmatpush1.bf16.msra.mxu0 %v350
    %896 = vmatprep.subr.bf16.mxu0 0
    %897 = vmatpush1.bf16.msra.mxu0 %v351
    %898 = vmatprep.subr.bf16.mxu0 0
    %899 = vmatpush1.bf16.msra.mxu0 %v352
    %900 = vmatprep.subr.bf16.mxu0 0
    %901 = vmatpush1.bf16.msra.mxu0 %v353
    %902 = vmatprep.subr.bf16.mxu0 0
    %903 = vmatpush1.bf16.msra.mxu0 0
    %904 = vmatprep.subr.bf16.mxu0 0
    %905 = vmatpush1.bf16.msra.mxu0 0
    %906 = vmatprep.subr.bf16.mxu0 0
    %907 = vmatpush1.bf16.msra.mxu0 0
    %908 = vmatprep.subr.bf16.mxu0 0
    %909 = vmatpush1.bf16.msra.mxu0 0
    %910 = vmatprep.subr.bf16.mxu0 0
    %911 = vmatpush1.bf16.msra.mxu0 0
    %912 = vmatprep.subr.bf16.mxu0 0
    %913 = vmatpush1.bf16.msra.mxu0 0
    %914 = vmatprep.subr.bf16.mxu0 0
    %915 = vmatpush1.bf16.msra.mxu0 0
    %916 = vmatprep.subr.bf16.mxu0 0
    %917 = vmatpush1.bf16.msra.mxu0 0
    %918 = vmatprep.subr.bf16.mxu0 0
    %919 = vmatpush1.bf16.msra.mxu0 0
    %920 = vmatprep.subr.bf16.mxu0 0
    %921 = vmatpush1.bf16.msra.mxu0 0
    %922 = vmatprep.subr.bf16.mxu0 0
    %923 = vmatpush1.bf16.msra.mxu0 0
    %924 = vmatprep.subr.bf16.mxu0 0
    %925 = vmatpush1.bf16.msra.mxu0 0
    %926 = vmatprep.mubr.bf16.mxu0 0
    %927 = vmatmul.mubr.bf16.gmra.mrb[0].mxu0 %v892
    %v928 = vpop.f32.mrb[0].mxu0
    %v929 = vadd.f32 0.0, %v928
    %v930 = vpop.f32.mrb[0].mxu0
    %v931 = vpop.f32.mrb[0].mxu0
    %v932 = vadd.f32 0.0, %v931
    %v933 = vpop.f32.mrb[0].mxu0
    %934 = vdwg.mxu0
    %v935 = vmax.f32 %v929, 1e-12
    %v936 = vmax.f32 %v932, 1e-12
    %v937 = vrcp.pop %v935
    %v938 = vrcp.pop %v936
    %v939 = vpack.c.bf16 %v748, %v744
    %v940 = vsel %vm94, %v890, 0
    %942 = vmatprep.subr.bf16.mxu0 0
    %943 = vmatpush1.bf16.msra.mxu0 %v939
    %944 = vmatprep.subr.bf16.mxu0 0
    %945 = vmatpush1.bf16.msra.mxu0 0
    %946 = vmatprep.subr.bf16.mxu0 0
    %947 = vmatpush1.bf16.msra.mxu0 0
    %948 = vmatprep.subr.bf16.mxu0 0
    %949 = vmatpush1.bf16.msra.mxu0 0
    %950 = vmatprep.subr.bf16.mxu0 0
    %951 = vmatpush1.bf16.msra.mxu0 0
    %952 = vmatprep.subr.bf16.mxu0 0
    %953 = vmatpush1.bf16.msra.mxu0 0
    %954 = vmatprep.subr.bf16.mxu0 0
    %955 = vmatpush1.bf16.msra.mxu0 0
    %956 = vmatprep.subr.bf16.mxu0 0
    %957 = vmatpush1.bf16.msra.mxu0 0
    %958 = vmatprep.subr.bf16.mxu0 0
    %959 = vmatpush1.bf16.msra.mxu0 0
    %960 = vmatprep.subr.bf16.mxu0 0
    %961 = vmatpush1.bf16.msra.mxu0 0
    %962 = vmatprep.subr.bf16.mxu0 0
    %963 = vmatpush1.bf16.msra.mxu0 0
    %964 = vmatprep.subr.bf16.mxu0 0
    %965 = vmatpush1.bf16.msra.mxu0 0
    %966 = vmatprep.subr.bf16.mxu0 0
    %967 = vmatpush1.bf16.msra.mxu0 0
    %968 = vmatprep.subr.bf16.mxu0 0
    %969 = vmatpush1.bf16.msra.mxu0 0
    %970 = vmatprep.subr.bf16.mxu0 0
    %971 = vmatpush1.bf16.msra.mxu0 0
    %972 = vmatprep.subr.bf16.mxu0 0
    %973 = vmatpush1.bf16.msra.mxu0 0
    %974 = vmatprep.mubr.bf16.mxu0 0
    %975 = vmatmul.mubr.bf16.gmra.mrb[0].mxu0 %v940
    %v976 = vpop.f32.mrb[0].mxu0
    %v977 = vadd.f32 0.0, %v976
    %v978 = vpop.f32.mrb[0].mxu0
    %v979 = vpop.f32.mrb[0].mxu0
    %v980 = vadd.f32 0.0, %v979
    %v981 = vpop.f32.mrb[0].mxu0
    %982 = vdwg.mxu0
    %984 = vset.pattern.permute.xlu0 0
    %985 = vperm.xlu0 %984, %v937
    %v986 = vpop.permute.xlu0 %985
    %989 = vset.pattern.permute.xlu0 0
    %990 = vperm.xlu0 %989, %v938
    %v991 = vpop.permute.xlu0 %990
    %v993 = vmul.f32 %v977, %v986
    %v994 = vmul.f32 %v980, %v991
    %v996 = vlaneseq
    %v997 = vshrl.u32 %v996, 7
    %v998 = vsub.s32 0, %v997
    %v999 = vrot.slane %v684, %v998
    %v1001 = vadd.f32 %v993, %v999
    %v1002 = vadd.f32 %v994, %v999
    %1004 = vrot.lane.b32.xlu0 %v890, 112
    %v1005 = vpop.permute.xlu0 %1004
    %1007 = vrot.lane.b32.xlu0 %v939, 96
    %v1008 = vpop.permute.xlu0 %1007
    %v1011 = vsel %vm94, %v1005, 0
    %1013 = vmatprep.subr.bf16.mxu0 0
    %1014 = vmatpush1.bf16.msra.mxu0 %v1008
    %1015 = vmatprep.subr.bf16.mxu0 0
    %1016 = vmatpush1.bf16.msra.mxu0 0
    %1017 = vmatprep.subr.bf16.mxu0 0
    %1018 = vmatpush1.bf16.msra.mxu0 0
    %1019 = vmatprep.subr.bf16.mxu0 0
    %1020 = vmatpush1.bf16.msra.mxu0 0
    %1021 = vmatprep.subr.bf16.mxu0 0
    %1022 = vmatpush1.bf16.msra.mxu0 0
    %1023 = vmatprep.subr.bf16.mxu0 0
    %1024 = vmatpush1.bf16.msra.mxu0 0
    %1025 = vmatprep.subr.bf16.mxu0 0
    %1026 = vmatpush1.bf16.msra.mxu0 0
    %1027 = vmatprep.subr.bf16.mxu0 0
    %1028 = vmatpush1.bf16.msra.mxu0 0
    %1029 = vmatprep.subr.bf16.mxu0 0
    %1030 = vmatpush1.bf16.msra.mxu0 0
    %1031 = vmatprep.subr.bf16.mxu0 0
    %1032 = vmatpush1.bf16.msra.mxu0 0
    %1033 = vmatprep.subr.bf16.mxu0 0
    %1034 = vmatpush1.bf16.msra.mxu0 0
    %1035 = vmatprep.subr.bf16.mxu0 0
    %1036 = vmatpush1.bf16.msra.mxu0 0
    %1037 = vmatprep.subr.bf16.mxu0 0
    %1038 = vmatpush1.bf16.msra.mxu0 0
    %1039 = vmatprep.subr.bf16.mxu0 0
    %1040 = vmatpush1.bf16.msra.mxu0 0
    %1041 = vmatprep.subr.bf16.mxu0 0
    %1042 = vmatpush1.bf16.msra.mxu0 0
    %1043 = vmatprep.subr.bf16.mxu0 0
    %1044 = vmatpush1.bf16.msra.mxu0 0
    %1045 = vmatprep.mubr.bf16.mxu0 0
    %1046 = vmatmul.mubr.bf16.gmra.mrb[0].mxu0 %v1011
    %v1047 = vpop.f32.mrb[0].mxu0
    %v1048 = vadd.f32 0.0, %v1047
    %v1049 = vpop.f32.mrb[0].mxu0
    %v1050 = vpop.f32.mrb[0].mxu0
    %v1051 = vadd.f32 0.0, %v1050
    %v1052 = vpop.f32.mrb[0].mxu0
    %1053 = vdwg.mxu0
    %1054 = vset.pattern.permute.xlu0 1
    %1055 = vperm.xlu0 %1054, %v937
    %v1056 = vpop.permute.xlu0 %1055
    %1058 = vset.pattern.permute.xlu0 1
    %1059 = vperm.xlu0 %1058, %v938
    %v1060 = vpop.permute.xlu0 %1059
    %v1062 = vmul.f32 %v1048, %v1056
    %v1063 = vmul.f32 %v1051, %v1060
    %1064 = vrot.lane.b32.xlu0 %v999, 96
    %v1065 = vpop.permute.xlu0 %1064
    %v1067 = vadd.f32 %v1062, %v1065
    %v1068 = vadd.f32 %v1063, %v1065
    %v1069 = vadd.f32 %v1001, %v1067
    %v1070 = vadd.f32 %v1002, %v1068
    %1071 = vrot.lane.b32.xlu0 %v890, 96
    %v1072 = vpop.permute.xlu0 %1071
    %1073 = vrot.lane.b32.xlu0 %v939, 64
    %v1074 = vpop.permute.xlu0 %1073
    %v1077 = vsel %vm94, %v1072, 0
    %1079 = vmatprep.subr.bf16.mxu0 0
    %1080 = vmatpush1.bf16.msra.mxu0 %v1074
    %1081 = vmatprep.subr.bf16.mxu0 0
    %1082 = vmatpush1.bf16.msra.mxu0 0
    %1083 = vmatprep.subr.bf16.mxu0 0
    %1084 = vmatpush1.bf16.msra.mxu0 0
    %1085 = vmatprep.subr.bf16.mxu0 0
    %1086 = vmatpush1.bf16.msra.mxu0 0
    %1087 = vmatprep.subr.bf16.mxu0 0
    %1088 = vmatpush1.bf16.msra.mxu0 0
    %1089 = vmatprep.subr.bf16.mxu0 0
    %1090 = vmatpush1.bf16.msra.mxu0 0
    %1091 = vmatprep.subr.bf16.mxu0 0
    %1092 = vmatpush1.bf16.msra.mxu0 0
    %1093 = vmatprep.subr.bf16.mxu0 0
    %1094 = vmatpush1.bf16.msra.mxu0 0
    %1095 = vmatprep.subr.bf16.mxu0 0
    %1096 = vmatpush1.bf16.msra.mxu0 0
    %1097 = vmatprep.subr.bf16.mxu0 0
    %1098 = vmatpush1.bf16.msra.mxu0 0
    %1099 = vmatprep.subr.bf16.mxu0 0
    %1100 = vmatpush1.bf16.msra.mxu0 0
    %1101 = vmatprep.subr.bf16.mxu0 0
    %1102 = vmatpush1.bf16.msra.mxu0 0
    %1103 = vmatprep.subr.bf16.mxu0 0
    %1104 = vmatpush1.bf16.msra.mxu0 0
    %1105 = vmatprep.subr.bf16.mxu0 0
    %1106 = vmatpush1.bf16.msra.mxu0 0
    %1107 = vmatprep.subr.bf16.mxu0 0
    %1108 = vmatpush1.bf16.msra.mxu0 0
    %1109 = vmatprep.subr.bf16.mxu0 0
    %1110 = vmatpush1.bf16.msra.mxu0 0
    %1111 = vmatprep.mubr.bf16.mxu0 0
    %1112 = vmatmul.mubr.bf16.gmra.mrb[0].mxu0 %v1077
    %v1113 = vpop.f32.mrb[0].mxu0
    %v1114 = vadd.f32 0.0, %v1113
    %v1115 = vpop.f32.mrb[0].mxu0
    %v1116 = vpop.f32.mrb[0].mxu0
    %v1117 = vadd.f32 0.0, %v1116
    %v1118 = vpop.f32.mrb[0].mxu0
    %1119 = vdwg.mxu0
    %1120 = vset.pattern.permute.xlu0 2
    %1121 = vperm.xlu0 %1120, %v937
    %v1122 = vpop.permute.xlu0 %1121
    %1124 = vset.pattern.permute.xlu0 2
    %1125 = vperm.xlu0 %1124, %v938
    %v1126 = vpop.permute.xlu0 %1125
    %v1128 = vmul.f32 %v1114, %v1122
    %v1129 = vmul.f32 %v1117, %v1126
    %1130 = vrot.lane.b32.xlu0 %v999, 64
    %v1131 = vpop.permute.xlu0 %1130
    %v1133 = vadd.f32 %v1128, %v1131
    %v1134 = vadd.f32 %v1129, %v1131
    %v1135 = vadd.f32 %v1069, %v1133
    %v1136 = vadd.f32 %v1070, %v1134
    %1137 = vrot.lane.b32.xlu0 %v890, 80
    %v1138 = vpop.permute.xlu0 %1137
    %1139 = vrot.lane.b32.xlu0 %v939, 32
    %v1140 = vpop.permute.xlu0 %1139
    %v1143 = vsel %vm94, %v1138, 0
    %1145 = vmatprep.subr.bf16.mxu0 0
    %1146 = vmatpush1.bf16.msra.mxu0 %v1140
    %1147 = vmatprep.subr.bf16.mxu0 0
    %1148 = vmatpush1.bf16.msra.mxu0 0
    %1149 = vmatprep.subr.bf16.mxu0 0
    %1150 = vmatpush1.bf16.msra.mxu0 0
    %1151 = vmatprep.subr.bf16.mxu0 0
    %1152 = vmatpush1.bf16.msra.mxu0 0
    %1153 = vmatprep.subr.bf16.mxu0 0
    %1154 = vmatpush1.bf16.msra.mxu0 0
    %1155 = vmatprep.subr.bf16.mxu0 0
    %1156 = vmatpush1.bf16.msra.mxu0 0
    %1157 = vmatprep.subr.bf16.mxu0 0
    %1158 = vmatpush1.bf16.msra.mxu0 0
    %1159 = vmatprep.subr.bf16.mxu0 0
    %1160 = vmatpush1.bf16.msra.mxu0 0
    %1161 = vmatprep.subr.bf16.mxu0 0
    %1162 = vmatpush1.bf16.msra.mxu0 0
    %1163 = vmatprep.subr.bf16.mxu0 0
    %1164 = vmatpush1.bf16.msra.mxu0 0
    %1165 = vmatprep.subr.bf16.mxu0 0
    %1166 = vmatpush1.bf16.msra.mxu0 0
    %1167 = vmatprep.subr.bf16.mxu0 0
    %1168 = vmatpush1.bf16.msra.mxu0 0
    %1169 = vmatprep.subr.bf16.mxu0 0
    %1170 = vmatpush1.bf16.msra.mxu0 0
    %1171 = vmatprep.subr.bf16.mxu0 0
    %1172 = vmatpush1.bf16.msra.mxu0 0
    %1173 = vmatprep.subr.bf16.mxu0 0
    %1174 = vmatpush1.bf16.msra.mxu0 0
    %1175 = vmatprep.subr.bf16.mxu0 0
    %1176 = vmatpush1.bf16.msra.mxu0 0
    %1177 = vmatprep.mubr.bf16.mxu0 0
    %1178 = vmatmul.mubr.bf16.gmra.mrb[0].mxu0 %v1143
    %v1179 = vpop.f32.mrb[0].mxu0
    %v1180 = vadd.f32 0.0, %v1179
    %v1181 = vpop.f32.mrb[0].mxu0
    %v1182 = vpop.f32.mrb[0].mxu0
    %v1183 = vadd.f32 0.0, %v1182
    %v1184 = vpop.f32.mrb[0].mxu0
    %1185 = vdwg.mxu0
    %1186 = vset.pattern.permute.xlu0 3
    %1187 = vperm.xlu0 %1186, %v937
    %v1188 = vpop.permute.xlu0 %1187
    %1190 = vset.pattern.permute.xlu0 3
    %1191 = vperm.xlu0 %1190, %v938
    %v1192 = vpop.permute.xlu0 %1191
    %v1194 = vmul.f32 %v1180, %v1188
    %v1195 = vmul.f32 %v1183, %v1192
    %1196 = vrot.lane.b32.xlu0 %v999, 32
    %v1197 = vpop.permute.xlu0 %1196
    %v1199 = vadd.f32 %v1194, %v1197
    %v1200 = vadd.f32 %v1195, %v1197
    %v1201 = vadd.f32 %v1135, %v1199
    %v1202 = vadd.f32 %v1136, %v1200
    %v1203 = vmul.f32 %v1201, 0.25
    %v1204 = vmul.f32 %v1202, 0.25
    %v1205 = vadd.f32 %v1203, %v56
    %v1206 = vadd.f32 %v1204, %v57
    %1207 = vst.msk [vmem:[#allocation7] sm:$0xff] %vm97, %v1205
    %1208 = vst.msk [vmem:[#allocation7 + $0x8] sm:$0xff] %vm97, %v1206
    // Predicated region
    $region38: #{tpu_custom_call.1} parent=1 // pred_check
      _
    $region39: #{tpu_custom_call.1} parent=1 // pred_check_branch
      %1210 = sbr.rel (0) target = $region41
    $region40: #{tpu_custom_call.1} parent=1 // pred_region
      %s1212 = ssub.s32 256, 256
      %1213 = vsyncadd [#allocation4], %s1212
      %s1214 = sshll.u32 [#allocation7], 4
      %s1215 = int_to_ptr.vmem [resolvable:$true] %s1214
      %1220 = dma.vmem_to_hbm [thread:$0]  %s1215, 256, %s7, [#allocation4], 128, 128, 8
    $region41: #{tpu_custom_call.1} parent=1 // pred_fallthru
      _
    // Predicated region
    $region42: #{tpu_custom_call.1} parent=1 // pred_check
      _
    $region43: #{tpu_custom_call.1} parent=1 // pred_check_branch
      %1222 = sbr.rel (0) target = $region45
    $region44: #{tpu_custom_call.1} parent=1 // pred_region
      %1223 = dma.done [#allocation4], 256
    $region45: #{tpu_custom_call.1} parent=1 // pred_fallthru
      _
    %1224 = vsyncpa [#allocation3], 1
    %1225 = vsyncpa [#allocation6], 1
    %1226 = vsyncpa [#allocation4], 1

</llo_original>
